<compile_context>
chip_gen: v6e
topology: v6e:2x2x1
jax: 0.10.0
libtpu: 0.0.40
codegen_flags: <defaults>
</compile_context>

<pallas_src>
import jax
import jax.numpy as jnp
from jax.experimental import pallas as pl
from jax.experimental.pallas import tpu as pltpu

# ------------------------- model hyper-parameters ---------------------------
DIM = 32                         # embedding dim
NUM_HEADS = 4
HEAD_DIM = DIM // NUM_HEADS
SCALE = HEAD_DIM ** (-0.5)       # qk_scale defaults to head_dim ** -0.5
TEMPERATURE = 1.0
LN_EPS = 1e-5


def _layernorm(x, gamma, beta):
    # x: (N, D); gamma/beta: (1, D). Matches PyTorch LayerNorm (biased var).
    mu = jnp.mean(x, axis=-1, keepdims=True)
    var = jnp.mean((x - mu) * (x - mu), axis=-1, keepdims=True)
    return (x - mu) * jax.lax.rsqrt(var + LN_EPS) * gamma + beta


def _attn_block_kernel(x_ref, p_ref, o_ref):
    """One batch chunk per grid step. x_ref: (TB, T, D); p_ref: (40, 4D)."""
    TB, T, D = x_ref.shape
    N = TB * T
    H, hd = NUM_HEADS, HEAD_DIM

    x = x_ref[...].reshape(N, D)          # rows; also the residual shortcut

    # ---- packed parameters (single lane-dense (40, 128) block) -------------
    W = p_ref[0:D, :]                     # (D, 4D)
    wqkv_t = W[:, 0:3 * D]                # (D, 3D)  W^T, scale folded into q cols
    wproj_t = W[:, 3 * D:4 * D]           # (D, D)   W^T
    brow = p_ref[D:D + 1, :]              # (1, 4D)
    bqkv = brow[:, 0:3 * D]               # (1, 3D)  scale folded into q part
    bproj = brow[:, 3 * D:4 * D]          # (1, D)
    lrow = p_ref[D + 1:D + 2, :]          # (1, 4D)
    g1, b1 = lrow[:, 0:D], lrow[:, D:2 * D]
    g2, b2 = lrow[:, 2 * D:3 * D], lrow[:, 3 * D:4 * D]

    # ---- pre-norm + QKV projection (whole chunk at once) --------------------
    xn = _layernorm(x, g1, b1)                                        # (N, D)
    qkv = jnp.dot(xn, wqkv_t, preferred_element_type=jnp.float32) + bqkv  # (N, 3D)

    # ---- multi-head attention, batched over the whole chunk -----------------
    # Each head's context is folded directly into the output projection
    # (equivalent to concat(heads) @ Wp^T) -> no concatenate, no scratch.
    y = jnp.zeros((N, D), jnp.float32)
    for h in range(H):
        lo = h * hd
        q_h = qkv[:, lo:lo + hd].reshape(TB, T, hd)          # scale pre-folded
        k_h = qkv[:, D + lo:D + lo + hd].reshape(TB, T, hd)
        v_h = qkv[:, 2 * D + lo:2 * D + lo + hd].reshape(TB, T, hd)

        s = jnp.einsum('bqd,bkd->bqk', q_h, k_h,
                       preferred_element_type=jnp.float32)   # (TB, T, T)
        s = s - jnp.max(s, axis=-1, keepdims=True)
        p = jnp.exp(s)
        p = p * pl.reciprocal(jnp.sum(p, axis=-1, keepdims=True), approx=True)
        o_h = jnp.einsum('bqk,bkd->bqd', p, v_h,
                         preferred_element_type=jnp.float32)  # (TB, T, hd)
        y = y + jnp.dot(o_h.reshape(N, hd), wproj_t[lo:lo + hd, :],
                        preferred_element_type=jnp.float32)

    # ---- proj bias + residual + post-norm ------------------------------------
    y = y + bproj + x
    y = _layernorm(y, g2, b2)
    o_ref[...] = y.reshape(TB, T, D).astype(o_ref.dtype)


def _pack_params(p):
    """Pack all weights into one lane-dense (40, 4*D) = (40, 128) f32 array.

    rows 0..D-1 : [ wqkv^T (scale folded into q cols) | wproj^T ]
    row  D      : [ bqkv (scale folded into q part)   | bproj   ]
    row  D+1    : [ g1 | b1 | g2 | b2 ]
    rows D+2..  : zero padding (sublane count multiple of 8)
    """
    eff_scale = SCALE / TEMPERATURE   # fold qk_scale and 1/temperature into q
    wqkv_t = p["wqkv"].T.astype(jnp.float32)            # (D, 3D)
    wqkv_t = wqkv_t.at[:, :DIM].multiply(eff_scale)
    bqkv = p["bqkv"].reshape(-1).astype(jnp.float32)
    bqkv = bqkv.at[:DIM].multiply(eff_scale)
    wproj_t = p["wproj"].T.astype(jnp.float32)          # (D, D)

    packed = jnp.zeros((40, 4 * DIM), jnp.float32)
    packed = packed.at[0:DIM, 0:3 * DIM].set(wqkv_t)
    packed = packed.at[0:DIM, 3 * DIM:4 * DIM].set(wproj_t)
    packed = packed.at[DIM, 0:3 * DIM].set(bqkv)
    packed = packed.at[DIM, 3 * DIM:4 * DIM].set(p["bproj"].reshape(-1))
    packed = packed.at[DIM + 1, 0:DIM].set(p["g1"].reshape(-1))
    packed = packed.at[DIM + 1, DIM:2 * DIM].set(p["b1"].reshape(-1))
    packed = packed.at[DIM + 1, 2 * DIM:3 * DIM].set(p["g2"].reshape(-1))
    packed = packed.at[DIM + 1, 3 * DIM:4 * DIM].set(p["b2"].reshape(-1))
    return packed


def _pick_batch_chunk(B, T, D):
    """Batch rows per grid step.

    - Default: whole batch in ONE grid step (per-step overhead dominates tiny
      blocks; matmuls want (B*T, D) slabs, not (T, D) slivers).
    - If each half of the batch still has >= 512 rows (v6e roofline guidance),
      use 2 parallel chunks so v7x's second TensorCore gets work.
    - Cap chunk size so double-buffered in+out f32 blocks stay far below the
      scoped VMEM limit (v7x: 64 MiB physical).
    """
    TB = B
    if B % 2 == 0 and (B // 2) * T >= 512:
        TB = B // 2
    block_bytes = lambda tb: 4 * tb * T * D * 4   # 2 bufs x (in + out) x f32
    while TB % 2 == 0 and block_bytes(TB) > (8 << 20):
        TB //= 2
    return TB


def transformer_within_modal(x, params):
    """x: (B, T, D) float32. params: dict of weights (see init_params)."""
    B, T, D = x.shape
    assert D == DIM

    packed = _pack_params(params)
    TB = _pick_batch_chunk(B, T, D)
    assert B % TB == 0
    grid = (B // TB,)

    return pl.pallas_call(
        _attn_block_kernel,
        out_shape=jax.ShapeDtypeStruct((B, T, D), x.dtype),
        grid_spec=pltpu.PrefetchScalarGridSpec(
            num_scalar_prefetch=0,
            grid=grid,
            in_specs=[
                pl.BlockSpec((TB, T, D), lambda b: (b, 0, 0)),      # x chunk
                pl.BlockSpec(packed.shape, lambda b: (0, 0)),       # packed params
            ],
            out_specs=pl.BlockSpec((TB, T, D), lambda b: (b, 0, 0)),
        ),
        compiler_params=pltpu.CompilerParams(
            dimension_semantics=("parallel",),
            vmem_limit_bytes=32 * 1024 * 1024),
    )(x, packed)


def init_params(key):
    """Deterministic synthetic init. LayerNorms use PyTorch defaults (1, 0)."""
    k1, k2, k3, k4 = jax.random.split(key, 4)
    std = 0.02
    return {
        "wqkv": std * jax.random.normal(k1, (3 * DIM, DIM), jnp.float32),
        "bqkv": std * jax.random.normal(k2, (1, 3 * DIM), jnp.float32),
        "wproj": std * jax.random.normal(k3, (DIM, DIM), jnp.float32),
        "bproj": std * jax.random.normal(k4, (1, DIM), jnp.float32),
        "g1": jnp.ones((1, DIM), jnp.float32),
        "b1": jnp.zeros((1, DIM), jnp.float32),
        "g2": jnp.ones((1, DIM), jnp.float32),
        "b2": jnp.zeros((1, DIM), jnp.float32),
    }


def _reference(x, p):
    """Pure-JAX reference mirroring the PyTorch forward (eval mode)."""
    B, T, D = x.shape
    H, hd = NUM_HEADS, HEAD_DIM

    def ln(v, g, b):
        mu = jnp.mean(v, -1, keepdims=True)
        var = jnp.mean((v - mu) ** 2, -1, keepdims=True)
        return (v - mu) / jnp.sqrt(var + LN_EPS) * g + b

    shortcut = x
    xn = ln(x, p["g1"], p["b1"])
    qkv = xn @ p["wqkv"].T + p["bqkv"]                          # (B,T,3D)
    qkv = qkv.reshape(B, T, 3, H, hd).transpose(2, 0, 3, 1, 4)  # (3,B,H,T,hd)
    q, k, v = qkv[0] * SCALE, qkv[1], qkv[2]
    attn = jax.nn.softmax((q @ jnp.swapaxes(k, -2, -1)) / TEMPERATURE, axis=-1)
    o = (attn @ v).transpose(0, 2, 1, 3).reshape(B, T, D)
    o = o @ p["wproj"].T + p["bproj"]
    o = o + shortcut
    return ln(o, p["g2"], p["b2"])


if __name__ == "__main__":
    key = jax.random.PRNGKey(0)
    kx, kp = jax.random.split(key)

    B, T = 2, 8
    x = jax.random.normal(kx, (B, T, DIM), jnp.float32)
    params = init_params(kp)

    out = jax.block_until_ready(transformer_within_modal(x, params))
    ref = _reference(x, params)

    assert out.shape == (B, T, DIM)
    err = jnp.max(jnp.abs(out - ref))
    # tolerance has a little margin for the approximate (EUP) softmax
    # reciprocal and the different per-head accumulation order.
    assert jnp.allclose(out, ref, atol=2e-4, rtol=2e-4), f"max err {err}"

    print("KERNEL_OK")
</pallas_src>

<mosaic_0001>
module attributes {stable_mosaic.version = 11 : i64} {
  func.func @_attn_block_kernel(%arg0: i32, %arg1: memref<2x8x32xf32, #tpu.memory_space<vmem>>, %arg2: memref<40x128xf32, #tpu.memory_space<vmem>>, %arg3: memref<2x8x32xf32, #tpu.memory_space<vmem>>) attributes {dimension_semantics = [#tpu.dimension_semantics<parallel>], iteration_bounds = array<i64: 1>, scalar_prefetch = 0 : i64, scratch_operands = 0 : i64, tpu.core_type = #tpu.core_type<tc>, window_params = [{transform_indices = @transform_0, window_bounds = array<i64: 2, 8, 32>}, {pipeline_mode = #tpu.pipeline_mode<synchronous>, transform_indices = @transform_1, window_bounds = array<i64: 40, 128>}, {transform_indices = @transform_2, window_bounds = array<i64: 2, 8, 32>}]} {
    %c0 = arith.constant 0 : index
    %c0_0 = arith.constant 0 : index
    %c0_1 = arith.constant 0 : index
    %0 = vector.load %arg1[%c0, %c0_0, %c0_1] : memref<2x8x32xf32, #tpu.memory_space<vmem>>, vector<2x8x32xf32>
    %1 = vector.shape_cast %0 : vector<2x8x32xf32> to vector<16x32xf32>
    %c0_2 = arith.constant 0 : index
    %c0_3 = arith.constant 0 : index
    %2 = vector.load %arg2[%c0_2, %c0_3] : memref<40x128xf32, #tpu.memory_space<vmem>>, vector<32x128xf32>
    %3 = vector.extract_strided_slice %2 {offsets = [0, 0], sizes = [32, 96], strides = [1, 1]} : vector<32x128xf32> to vector<32x96xf32>
    %4 = vector.extract_strided_slice %2 {offsets = [0, 96], sizes = [32, 32], strides = [1, 1]} : vector<32x128xf32> to vector<32x32xf32>
    %c32 = arith.constant 32 : index
    %c0_4 = arith.constant 0 : index
    %5 = vector.load %arg2[%c32, %c0_4] : memref<40x128xf32, #tpu.memory_space<vmem>>, vector<1x128xf32>
    %6 = vector.extract_strided_slice %5 {offsets = [0, 0], sizes = [1, 96], strides = [1, 1]} : vector<1x128xf32> to vector<1x96xf32>
    %7 = vector.extract_strided_slice %5 {offsets = [0, 96], sizes = [1, 32], strides = [1, 1]} : vector<1x128xf32> to vector<1x32xf32>
    %c33 = arith.constant 33 : index
    %c0_5 = arith.constant 0 : index
    %8 = vector.load %arg2[%c33, %c0_5] : memref<40x128xf32, #tpu.memory_space<vmem>>, vector<1x128xf32>
    %9 = vector.extract_strided_slice %8 {offsets = [0, 0], sizes = [1, 32], strides = [1, 1]} : vector<1x128xf32> to vector<1x32xf32>
    %10 = vector.extract_strided_slice %8 {offsets = [0, 32], sizes = [1, 32], strides = [1, 1]} : vector<1x128xf32> to vector<1x32xf32>
    %11 = vector.extract_strided_slice %8 {offsets = [0, 64], sizes = [1, 32], strides = [1, 1]} : vector<1x128xf32> to vector<1x32xf32>
    %12 = vector.extract_strided_slice %8 {offsets = [0, 96], sizes = [1, 32], strides = [1, 1]} : vector<1x128xf32> to vector<1x32xf32>
    %cst = arith.constant dense<0.000000e+00> : vector<16xf32>
    %13 = vector.multi_reduction <add>, %1, %cst [1] : vector<16x32xf32> to vector<16xf32>
    %14 = vector.shape_cast %13 : vector<16xf32> to vector<16x1xf32>
    %cst_6 = arith.constant 3.200000e+01 : f32
    %15 = vector.broadcast %cst_6 : f32 to vector<16x1xf32>
    %16 = arith.divf %14, %15 : vector<16x1xf32>
    %17 = vector.broadcast %16 : vector<16x1xf32> to vector<16x32xf32>
    %18 = arith.subf %1, %17 : vector<16x32xf32>
    %19 = vector.broadcast %16 : vector<16x1xf32> to vector<16x32xf32>
    %20 = arith.subf %1, %19 : vector<16x32xf32>
    %21 = arith.mulf %18, %20 : vector<16x32xf32>
    %cst_7 = arith.constant dense<0.000000e+00> : vector<16xf32>
    %22 = vector.multi_reduction <add>, %21, %cst_7 [1] : vector<16x32xf32> to vector<16xf32>
    %23 = vector.shape_cast %22 : vector<16xf32> to vector<16x1xf32>
    %cst_8 = arith.constant 3.200000e+01 : f32
    %24 = vector.broadcast %cst_8 : f32 to vector<16x1xf32>
    %25 = arith.divf %23, %24 : vector<16x1xf32>
    %26 = vector.broadcast %16 : vector<16x1xf32> to vector<16x32xf32>
    %27 = arith.subf %1, %26 : vector<16x32xf32>
    %cst_9 = arith.constant 9.99999974E-6 : f32
    %28 = vector.broadcast %cst_9 : f32 to vector<16x1xf32>
    %29 = arith.addf %25, %28 : vector<16x1xf32>
    %30 = math.rsqrt %29 : vector<16x1xf32>
    %31 = vector.broadcast %30 : vector<16x1xf32> to vector<16x32xf32>
    %32 = arith.mulf %27, %31 : vector<16x32xf32>
    %33 = vector.broadcast %9 : vector<1x32xf32> to vector<16x32xf32>
    %34 = arith.mulf %32, %33 : vector<16x32xf32>
    %35 = vector.broadcast %10 : vector<1x32xf32> to vector<16x32xf32>
    %36 = arith.addf %34, %35 : vector<16x32xf32>
    %cst_10 = arith.constant dense<0.000000e+00> : vector<16x96xf32>
    %37 = tpu.matmul %36, %3, %cst_10 {dimension_numbers = #tpu.dot_dimension_numbers<[1], [0], [0], [1], [0, 0, 1, 1], [], []>} : vector<16x32xf32>, vector<32x96xf32>, vector<16x96xf32> -> vector<16x96xf32>
    %38 = vector.broadcast %6 : vector<1x96xf32> to vector<16x96xf32>
    %39 = arith.addf %37, %38 : vector<16x96xf32>
    %cst_11 = arith.constant 0.000000e+00 : f32
    %40 = vector.broadcast %cst_11 : f32 to vector<16x32xf32>
    %41 = vector.extract_strided_slice %39 {offsets = [0, 0], sizes = [16, 8], strides = [1, 1]} : vector<16x96xf32> to vector<16x8xf32>
    %42 = vector.shape_cast %41 : vector<16x8xf32> to vector<2x8x8xf32>
    %43 = vector.extract_strided_slice %39 {offsets = [0, 32], sizes = [16, 8], strides = [1, 1]} : vector<16x96xf32> to vector<16x8xf32>
    %44 = vector.shape_cast %43 : vector<16x8xf32> to vector<2x8x8xf32>
    %45 = vector.extract_strided_slice %39 {offsets = [0, 64], sizes = [16, 8], strides = [1, 1]} : vector<16x96xf32> to vector<16x8xf32>
    %46 = vector.shape_cast %45 : vector<16x8xf32> to vector<2x8x8xf32>
    "tpu.trace_start"() <{level = 10 : i32, message = "bqd,bkd->bqk"}> : () -> ()
    %cst_12 = arith.constant dense<0.000000e+00> : vector<2x8x8xf32>
    %47 = tpu.matmul %42, %44, %cst_12 {dimension_numbers = #tpu.dot_dimension_numbers<[2], [2], [1], [1], [0, 0, 0, 1, 1, 1], [0], [0]>} : vector<2x8x8xf32>, vector<2x8x8xf32>, vector<2x8x8xf32> -> vector<2x8x8xf32>
    "tpu.trace_stop"() : () -> ()
    %cst_13 = arith.constant dense<0xFF800000> : vector<2x8xf32>
    %48 = vector.multi_reduction <maximumf>, %47, %cst_13 [2] : vector<2x8x8xf32> to vector<2x8xf32>
    %49 = vector.shape_cast %48 : vector<2x8xf32> to vector<2x8x1xf32>
    %50 = vector.broadcast %49 : vector<2x8x1xf32> to vector<2x8x8xf32>
    %51 = arith.subf %47, %50 : vector<2x8x8xf32>
    %52 = math.exp %51 : vector<2x8x8xf32>
    %cst_14 = arith.constant dense<0.000000e+00> : vector<2x8xf32>
    %53 = vector.multi_reduction <add>, %52, %cst_14 [2] : vector<2x8x8xf32> to vector<2x8xf32>
    %54 = vector.shape_cast %53 : vector<2x8xf32> to vector<2x8x1xf32>
    %55 = tpu.reciprocal %54 {approx = true} : vector<2x8x1xf32> -> vector<2x8x1xf32>
    %56 = vector.broadcast %55 : vector<2x8x1xf32> to vector<2x8x8xf32>
    %57 = arith.mulf %52, %56 : vector<2x8x8xf32>
    "tpu.trace_start"() <{level = 10 : i32, message = "bqk,bkd->bqd"}> : () -> ()
    %cst_15 = arith.constant dense<0.000000e+00> : vector<2x8x8xf32>
    %58 = tpu.matmul %57, %46, %cst_15 {dimension_numbers = #tpu.dot_dimension_numbers<[2], [1], [1], [2], [0, 0, 0, 1, 1, 2], [0], [0]>} : vector<2x8x8xf32>, vector<2x8x8xf32>, vector<2x8x8xf32> -> vector<2x8x8xf32>
    "tpu.trace_stop"() : () -> ()
    %59 = vector.shape_cast %58 : vector<2x8x8xf32> to vector<16x8xf32>
    %60 = vector.extract_strided_slice %4 {offsets = [0, 0], sizes = [8, 32], strides = [1, 1]} : vector<32x32xf32> to vector<8x32xf32>
    %cst_16 = arith.constant dense<0.000000e+00> : vector<16x32xf32>
    %61 = tpu.matmul %59, %60, %cst_16 {dimension_numbers = #tpu.dot_dimension_numbers<[1], [0], [0], [1], [0, 0, 1, 1], [], []>} : vector<16x8xf32>, vector<8x32xf32>, vector<16x32xf32> -> vector<16x32xf32>
    %62 = arith.addf %40, %61 : vector<16x32xf32>
    %63 = vector.extract_strided_slice %39 {offsets = [0, 8], sizes = [16, 8], strides = [1, 1]} : vector<16x96xf32> to vector<16x8xf32>
    %64 = vector.shape_cast %63 : vector<16x8xf32> to vector<2x8x8xf32>
    %65 = vector.extract_strided_slice %39 {offsets = [0, 40], sizes = [16, 8], strides = [1, 1]} : vector<16x96xf32> to vector<16x8xf32>
    %66 = vector.shape_cast %65 : vector<16x8xf32> to vector<2x8x8xf32>
    %67 = vector.extract_strided_slice %39 {offsets = [0, 72], sizes = [16, 8], strides = [1, 1]} : vector<16x96xf32> to vector<16x8xf32>
    %68 = vector.shape_cast %67 : vector<16x8xf32> to vector<2x8x8xf32>
    "tpu.trace_start"() <{level = 10 : i32, message = "bqd,bkd->bqk"}> : () -> ()
    %cst_17 = arith.constant dense<0.000000e+00> : vector<2x8x8xf32>
    %69 = tpu.matmul %64, %66, %cst_17 {dimension_numbers = #tpu.dot_dimension_numbers<[2], [2], [1], [1], [0, 0, 0, 1, 1, 1], [0], [0]>} : vector<2x8x8xf32>, vector<2x8x8xf32>, vector<2x8x8xf32> -> vector<2x8x8xf32>
    "tpu.trace_stop"() : () -> ()
    %cst_18 = arith.constant dense<0xFF800000> : vector<2x8xf32>
    %70 = vector.multi_reduction <maximumf>, %69, %cst_18 [2] : vector<2x8x8xf32> to vector<2x8xf32>
    %71 = vector.shape_cast %70 : vector<2x8xf32> to vector<2x8x1xf32>
    %72 = vector.broadcast %71 : vector<2x8x1xf32> to vector<2x8x8xf32>
    %73 = arith.subf %69, %72 : vector<2x8x8xf32>
    %74 = math.exp %73 : vector<2x8x8xf32>
    %cst_19 = arith.constant dense<0.000000e+00> : vector<2x8xf32>
    %75 = vector.multi_reduction <add>, %74, %cst_19 [2] : vector<2x8x8xf32> to vector<2x8xf32>
    %76 = vector.shape_cast %75 : vector<2x8xf32> to vector<2x8x1xf32>
    %77 = tpu.reciprocal %76 {approx = true} : vector<2x8x1xf32> -> vector<2x8x1xf32>
    %78 = vector.broadcast %77 : vector<2x8x1xf32> to vector<2x8x8xf32>
    %79 = arith.mulf %74, %78 : vector<2x8x8xf32>
    "tpu.trace_start"() <{level = 10 : i32, message = "bqk,bkd->bqd"}> : () -> ()
    %cst_20 = arith.constant dense<0.000000e+00> : vector<2x8x8xf32>
    %80 = tpu.matmul %79, %68, %cst_20 {dimension_numbers = #tpu.dot_dimension_numbers<[2], [1], [1], [2], [0, 0, 0, 1, 1, 2], [0], [0]>} : vector<2x8x8xf32>, vector<2x8x8xf32>, vector<2x8x8xf32> -> vector<2x8x8xf32>
    "tpu.trace_stop"() : () -> ()
    %81 = vector.shape_cast %80 : vector<2x8x8xf32> to vector<16x8xf32>
    %82 = vector.extract_strided_slice %4 {offsets = [8, 0], sizes = [8, 32], strides = [1, 1]} : vector<32x32xf32> to vector<8x32xf32>
    %cst_21 = arith.constant dense<0.000000e+00> : vector<16x32xf32>
    %83 = tpu.matmul %81, %82, %cst_21 {dimension_numbers = #tpu.dot_dimension_numbers<[1], [0], [0], [1], [0, 0, 1, 1], [], []>} : vector<16x8xf32>, vector<8x32xf32>, vector<16x32xf32> -> vector<16x32xf32>
    %84 = arith.addf %62, %83 : vector<16x32xf32>
    %85 = vector.extract_strided_slice %39 {offsets = [0, 16], sizes = [16, 8], strides = [1, 1]} : vector<16x96xf32> to vector<16x8xf32>
    %86 = vector.shape_cast %85 : vector<16x8xf32> to vector<2x8x8xf32>
    %87 = vector.extract_strided_slice %39 {offsets = [0, 48], sizes = [16, 8], strides = [1, 1]} : vector<16x96xf32> to vector<16x8xf32>
    %88 = vector.shape_cast %87 : vector<16x8xf32> to vector<2x8x8xf32>
    %89 = vector.extract_strided_slice %39 {offsets = [0, 80], sizes = [16, 8], strides = [1, 1]} : vector<16x96xf32> to vector<16x8xf32>
    %90 = vector.shape_cast %89 : vector<16x8xf32> to vector<2x8x8xf32>
    "tpu.trace_start"() <{level = 10 : i32, message = "bqd,bkd->bqk"}> : () -> ()
    %cst_22 = arith.constant dense<0.000000e+00> : vector<2x8x8xf32>
    %91 = tpu.matmul %86, %88, %cst_22 {dimension_numbers = #tpu.dot_dimension_numbers<[2], [2], [1], [1], [0, 0, 0, 1, 1, 1], [0], [0]>} : vector<2x8x8xf32>, vector<2x8x8xf32>, vector<2x8x8xf32> -> vector<2x8x8xf32>
    "tpu.trace_stop"() : () -> ()
    %cst_23 = arith.constant dense<0xFF800000> : vector<2x8xf32>
    %92 = vector.multi_reduction <maximumf>, %91, %cst_23 [2] : vector<2x8x8xf32> to vector<2x8xf32>
    %93 = vector.shape_cast %92 : vector<2x8xf32> to vector<2x8x1xf32>
    %94 = vector.broadcast %93 : vector<2x8x1xf32> to vector<2x8x8xf32>
    %95 = arith.subf %91, %94 : vector<2x8x8xf32>
    %96 = math.exp %95 : vector<2x8x8xf32>
    %cst_24 = arith.constant dense<0.000000e+00> : vector<2x8xf32>
    %97 = vector.multi_reduction <add>, %96, %cst_24 [2] : vector<2x8x8xf32> to vector<2x8xf32>
    %98 = vector.shape_cast %97 : vector<2x8xf32> to vector<2x8x1xf32>
    %99 = tpu.reciprocal %98 {approx = true} : vector<2x8x1xf32> -> vector<2x8x1xf32>
    %100 = vector.broadcast %99 : vector<2x8x1xf32> to vector<2x8x8xf32>
    %101 = arith.mulf %96, %100 : vector<2x8x8xf32>
    "tpu.trace_start"() <{level = 10 : i32, message = "bqk,bkd->bqd"}> : () -> ()
    %cst_25 = arith.constant dense<0.000000e+00> : vector<2x8x8xf32>
    %102 = tpu.matmul %101, %90, %cst_25 {dimension_numbers = #tpu.dot_dimension_numbers<[2], [1], [1], [2], [0, 0, 0, 1, 1, 2], [0], [0]>} : vector<2x8x8xf32>, vector<2x8x8xf32>, vector<2x8x8xf32> -> vector<2x8x8xf32>
    "tpu.trace_stop"() : () -> ()
    %103 = vector.shape_cast %102 : vector<2x8x8xf32> to vector<16x8xf32>
    %104 = vector.extract_strided_slice %4 {offsets = [16, 0], sizes = [8, 32], strides = [1, 1]} : vector<32x32xf32> to vector<8x32xf32>
    %cst_26 = arith.constant dense<0.000000e+00> : vector<16x32xf32>
    %105 = tpu.matmul %103, %104, %cst_26 {dimension_numbers = #tpu.dot_dimension_numbers<[1], [0], [0], [1], [0, 0, 1, 1], [], []>} : vector<16x8xf32>, vector<8x32xf32>, vector<16x32xf32> -> vector<16x32xf32>
    %106 = arith.addf %84, %105 : vector<16x32xf32>
    %107 = vector.extract_strided_slice %39 {offsets = [0, 24], sizes = [16, 8], strides = [1, 1]} : vector<16x96xf32> to vector<16x8xf32>
    %108 = vector.shape_cast %107 : vector<16x8xf32> to vector<2x8x8xf32>
    %109 = vector.extract_strided_slice %39 {offsets = [0, 56], sizes = [16, 8], strides = [1, 1]} : vector<16x96xf32> to vector<16x8xf32>
    %110 = vector.shape_cast %109 : vector<16x8xf32> to vector<2x8x8xf32>
    %111 = vector.extract_strided_slice %39 {offsets = [0, 88], sizes = [16, 8], strides = [1, 1]} : vector<16x96xf32> to vector<16x8xf32>
    %112 = vector.shape_cast %111 : vector<16x8xf32> to vector<2x8x8xf32>
    "tpu.trace_start"() <{level = 10 : i32, message = "bqd,bkd->bqk"}> : () -> ()
    %cst_27 = arith.constant dense<0.000000e+00> : vector<2x8x8xf32>
    %113 = tpu.matmul %108, %110, %cst_27 {dimension_numbers = #tpu.dot_dimension_numbers<[2], [2], [1], [1], [0, 0, 0, 1, 1, 1], [0], [0]>} : vector<2x8x8xf32>, vector<2x8x8xf32>, vector<2x8x8xf32> -> vector<2x8x8xf32>
    "tpu.trace_stop"() : () -> ()
    %cst_28 = arith.constant dense<0xFF800000> : vector<2x8xf32>
    %114 = vector.multi_reduction <maximumf>, %113, %cst_28 [2] : vector<2x8x8xf32> to vector<2x8xf32>
    %115 = vector.shape_cast %114 : vector<2x8xf32> to vector<2x8x1xf32>
    %116 = vector.broadcast %115 : vector<2x8x1xf32> to vector<2x8x8xf32>
    %117 = arith.subf %113, %116 : vector<2x8x8xf32>
    %118 = math.exp %117 : vector<2x8x8xf32>
    %cst_29 = arith.constant dense<0.000000e+00> : vector<2x8xf32>
    %119 = vector.multi_reduction <add>, %118, %cst_29 [2] : vector<2x8x8xf32> to vector<2x8xf32>
    %120 = vector.shape_cast %119 : vector<2x8xf32> to vector<2x8x1xf32>
    %121 = tpu.reciprocal %120 {approx = true} : vector<2x8x1xf32> -> vector<2x8x1xf32>
    %122 = vector.broadcast %121 : vector<2x8x1xf32> to vector<2x8x8xf32>
    %123 = arith.mulf %118, %122 : vector<2x8x8xf32>
    "tpu.trace_start"() <{level = 10 : i32, message = "bqk,bkd->bqd"}> : () -> ()
    %cst_30 = arith.constant dense<0.000000e+00> : vector<2x8x8xf32>
    %124 = tpu.matmul %123, %112, %cst_30 {dimension_numbers = #tpu.dot_dimension_numbers<[2], [1], [1], [2], [0, 0, 0, 1, 1, 2], [0], [0]>} : vector<2x8x8xf32>, vector<2x8x8xf32>, vector<2x8x8xf32> -> vector<2x8x8xf32>
    "tpu.trace_stop"() : () -> ()
    %125 = vector.shape_cast %124 : vector<2x8x8xf32> to vector<16x8xf32>
    %126 = vector.extract_strided_slice %4 {offsets = [24, 0], sizes = [8, 32], strides = [1, 1]} : vector<32x32xf32> to vector<8x32xf32>
    %cst_31 = arith.constant dense<0.000000e+00> : vector<16x32xf32>
    %127 = tpu.matmul %125, %126, %cst_31 {dimension_numbers = #tpu.dot_dimension_numbers<[1], [0], [0], [1], [0, 0, 1, 1], [], []>} : vector<16x8xf32>, vector<8x32xf32>, vector<16x32xf32> -> vector<16x32xf32>
    %128 = arith.addf %106, %127 : vector<16x32xf32>
    %129 = vector.broadcast %7 : vector<1x32xf32> to vector<16x32xf32>
    %130 = arith.addf %128, %129 : vector<16x32xf32>
    %131 = arith.addf %130, %1 : vector<16x32xf32>
    %cst_32 = arith.constant dense<0.000000e+00> : vector<16xf32>
    %132 = vector.multi_reduction <add>, %131, %cst_32 [1] : vector<16x32xf32> to vector<16xf32>
    %133 = vector.shape_cast %132 : vector<16xf32> to vector<16x1xf32>
    %cst_33 = arith.constant 3.200000e+01 : f32
    %134 = vector.broadcast %cst_33 : f32 to vector<16x1xf32>
    %135 = arith.divf %133, %134 : vector<16x1xf32>
    %136 = vector.broadcast %135 : vector<16x1xf32> to vector<16x32xf32>
    %137 = arith.subf %131, %136 : vector<16x32xf32>
    %138 = vector.broadcast %135 : vector<16x1xf32> to vector<16x32xf32>
    %139 = arith.subf %131, %138 : vector<16x32xf32>
    %140 = arith.mulf %137, %139 : vector<16x32xf32>
    %cst_34 = arith.constant dense<0.000000e+00> : vector<16xf32>
    %141 = vector.multi_reduction <add>, %140, %cst_34 [1] : vector<16x32xf32> to vector<16xf32>
    %142 = vector.shape_cast %141 : vector<16xf32> to vector<16x1xf32>
    %cst_35 = arith.constant 3.200000e+01 : f32
    %143 = vector.broadcast %cst_35 : f32 to vector<16x1xf32>
    %144 = arith.divf %142, %143 : vector<16x1xf32>
    %145 = vector.broadcast %135 : vector<16x1xf32> to vector<16x32xf32>
    %146 = arith.subf %131, %145 : vector<16x32xf32>
    %cst_36 = arith.constant 9.99999974E-6 : f32
    %147 = vector.broadcast %cst_36 : f32 to vector<16x1xf32>
    %148 = arith.addf %144, %147 : vector<16x1xf32>
    %149 = math.rsqrt %148 : vector<16x1xf32>
    %150 = vector.broadcast %149 : vector<16x1xf32> to vector<16x32xf32>
    %151 = arith.mulf %146, %150 : vector<16x32xf32>
    %152 = vector.broadcast %11 : vector<1x32xf32> to vector<16x32xf32>
    %153 = arith.mulf %151, %152 : vector<16x32xf32>
    %154 = vector.broadcast %12 : vector<1x32xf32> to vector<16x32xf32>
    %155 = arith.addf %153, %154 : vector<16x32xf32>
    %156 = vector.shape_cast %155 : vector<16x32xf32> to vector<2x8x32xf32>
    %c0_37 = arith.constant 0 : index
    %c0_38 = arith.constant 0 : index
    %c0_39 = arith.constant 0 : index
    %157 = vector.load %arg3[%c0_37, %c0_38, %c0_39] : memref<2x8x32xf32, #tpu.memory_space<vmem>>, vector<2x8x32xf32>
    tpu.vector_store %arg3[%c0_37, %c0_38, %c0_39], %156 {strides = array<i32>} : memref<2x8x32xf32, #tpu.memory_space<vmem>>, vector<2x8x32xf32>,
    return
  }
  func.func @transform_0(%arg0: i32) -> (i32, i32, i32) {
    %c0_i32 = arith.constant 0 : i32
    %c0_i32_0 = arith.constant 0 : i32
    %c0_i32_1 = arith.constant 0 : i32
    return %arg0, %c0_i32, %c0_i32_0 : i32, i32, i32
  }
  func.func @transform_1(%arg0: i32) -> (i32, i32) {
    %c0_i32 = arith.constant 0 : i32
    %c0_i32_0 = arith.constant 0 : i32
    %c0_i32_1 = arith.constant 0 : i32
    return %c0_i32, %c0_i32_0 : i32, i32
  }
  func.func @transform_2(%arg0: i32) -> (i32, i32, i32) {
    %c0_i32 = arith.constant 0 : i32
    %c0_i32_0 = arith.constant 0 : i32
    %c0_i32_1 = arith.constant 0 : i32
    return %arg0, %c0_i32, %c0_i32_0 : i32, i32, i32
  }
}

</mosaic_0001>

<llo_original>
// kernel: tpu_custom_call.1
$region0: #{tpu_custom_call.1}
  #allocation0 [shape = 'u32[]', space=smem, size = 0x4, offset = 0x4, fixed_abs, tag = 'smem constant byte address 0x4 - core index']
  #allocation1 [shape = 'u32[144,128]{1,0:T(1,128)}', space=vmem, size = 0x12000, scoped, tag = 'internal scratch']
  %s0 = inlined_call_operand.hbm [shape: f32[2,8,32], index: 0, kind: input, shape index: {}]
  %s1 = inlined_call_operand.hbm [shape: f32[40,128], index: 1, kind: input, shape index: {}]
  %s2 = inlined_call_operand.hbm [shape: f32[2,8,32], index: 2, kind: output, shape index: {}]
  %s3 = sld [smem:[#allocation0]]
  $region26: #{tpu_custom_call.1} parent=0
    _
  %s5 = ssub.s32 1, %s3
  %s6 = scalar_select 0, %s5, %s3
  $region1: #{tpu_custom_call.1} parent=0
    #allocation2 [shape = 'u8[8192]{0}', space=vmem, size = 0x2000, scoped, tag = 'input window, operand 0, single buffered']
    #allocation3 [shape = 's32[1]{0}', space=sflag, size = 0x4, scoped, tag = 'scoped memory for tpu_custom_call.1']
    #allocation4 [shape = 's32[1]{0}', space=sflag, size = 0x4, scoped, tag = 'scoped memory for tpu_custom_call.1']
    #allocation5 [shape = 'u8[20480]{0}', space=vmem, size = 0x5000, scoped, tag = 'input window, operand 1, single buffered']
    #allocation6 [shape = 's32[1]{0}', space=sflag, size = 0x4, scoped, tag = 'scoped memory for tpu_custom_call.1']
    #allocation7 [shape = 'u8[8192]{0}', space=vmem, size = 0x2000, scoped, tag = 'output window, operand 0, single buffered']
    %7 = vsyncpa [#allocation3], 0
    %8 = vsyncpa [#allocation6], 0
    %9 = vsyncpa [#allocation4], 0
    // Predicated region
    $region2: #{tpu_custom_call.1} parent=1 // pred_check
      _
    $region3: #{tpu_custom_call.1} parent=1 // pred_check_branch
      %11 = sbr.rel (0) target = $region5
    $region4: #{tpu_custom_call.1} parent=1 // pred_region
      %s13 = ssub.s32 256, 256
      %14 = vsyncadd [#allocation3], %s13
      %s15 = sshll.u32 [#allocation2], 4
      %s16 = int_to_ptr.vmem [resolvable:$true] %s15
      %21 = dma.hbm_to_vmem [thread:$0]  %s0, 256, %s16, [#allocation3], 128, 128, 8
    $region5: #{tpu_custom_call.1} parent=1 // pred_fallthru
      _
    // Predicated region
    $region6: #{tpu_custom_call.1} parent=1 // pred_check
      _
    $region7: #{tpu_custom_call.1} parent=1 // pred_check_branch
      %23 = sbr.rel (0) target = $region9
    $region8: #{tpu_custom_call.1} parent=1 // pred_region
      %s25 = ssub.s32 640, 640
      %26 = vsyncadd [#allocation6], %s25
      %s27 = sshll.u32 [#allocation5], 4
      %s28 = int_to_ptr.vmem [resolvable:$true] %s27
      %33 = dma.hbm_to_vmem [thread:$0]  %s1, 640, %s28, [#allocation6], 128, 128, 8
    $region9: #{tpu_custom_call.1} parent=1 // pred_fallthru
      _
    // Predicated region
    $region10: #{tpu_custom_call.1} parent=1 // pred_check
      _
    $region11: #{tpu_custom_call.1} parent=1 // pred_check_branch
      %35 = sbr.rel (0) target = $region13
    $region12: #{tpu_custom_call.1} parent=1 // pred_region
      %36 = dma.done [#allocation3], 256
    $region13: #{tpu_custom_call.1} parent=1 // pred_fallthru
      _
    // Predicated region
    $region14: #{tpu_custom_call.1} parent=1 // pred_check
      _
    $region15: #{tpu_custom_call.1} parent=1 // pred_check_branch
      %38 = sbr.rel (0) target = $region17
    $region16: #{tpu_custom_call.1} parent=1 // pred_region
      %39 = dma.done [#allocation6], 640
    $region17: #{tpu_custom_call.1} parent=1 // pred_fallthru
      _
    %v40 = vld [vmem:[#allocation2] sm:$0xff]
    %v41 = vld [vmem:[#allocation2 + $0x8] sm:$0xff]
    %v42 = vld [vmem:[#allocation5] sm:$0xff]
    %v43 = vld [vmem:[#allocation5 + $0x8] sm:$0xff]
    %v44 = vld [vmem:[#allocation5 + $0x10] sm:$0xff]
    %v45 = vld [vmem:[#allocation5 + $0x18] sm:$0xff]
    %v46 = vld [vmem:[#allocation5 + $0x20] sm:$0x1]
    %v47 = vld [vmem:[#allocation5 + $0x21] sm:$0x1]
    %vm48 = vcmask 261120
    %v49 = vsel %vm48, %v40, 0.0
    %50 = vadd.xlane.f32.xlu0 %v49
    %v51 = vpop.xlane.xlu0 %50
    %v52 = vsel %vm48, %v41, 0.0
    %53 = vadd.xlane.f32.xlu0 %v52
    %v54 = vpop.xlane.xlu0 %53
    %v55 = vrcp.pop 32.0
    %v56 = vmul.f32 %v51, %v55
    %v57 = vmul.f32 %v54, %v55
    %v58 = vsub.f32 %v40, %v56
    %v59 = vsub.f32 %v41, %v57
    %v60 = vmul.f32 %v58, %v58
    %v61 = vmul.f32 %v59, %v59
    %v62 = vsel %vm48, %v60, 0.0
    %63 = vadd.xlane.f32.xlu0 %v62
    %v64 = vpop.xlane.xlu0 %63
    %v65 = vsel %vm48, %v61, 0.0
    %66 = vadd.xlane.f32.xlu0 %v65
    %v67 = vpop.xlane.xlu0 %66
    %v68 = vmul.f32 %v64, %v55
    %v69 = vmul.f32 %v67, %v55
    %v70 = vadd.f32 %v68, 1e-05
    %v71 = vadd.f32 %v69, 1e-05
    %v72 = vrsqrt.pop %v70
    %v73 = vrsqrt.pop %v71
    %v74 = vmul.f32 %v58, %v72
    %v75 = vmul.f32 %v59, %v73
    %v76 = vlaneseq
    %v77 = vshrl.u32 %v76, 7
    %v78 = vsub.s32 0, %v77
    %v79 = vrot.slane %v47, %v78
    %v80 = vmul.f32 %v74, %v79
    %v81 = vmul.f32 %v75, %v79
    %83 = vrot.lane.b32.xlu0 %v79, 96
    %v84 = vpop.permute.xlu0 %83
    %v86 = vadd.f32 %v80, %v84
    %v87 = vadd.f32 %v81, %v84
    %v88 = vlaneseq
    %v89 = vshrl.u32 %v88, 7
    %v90 = vsub.s32 0, %v89
    %v91 = vrot.slane %v46, %v90
    %v93 = vsel %vm48, %v86, 0
    %v96 = vsel %vm48, %v87, 0
    %98 = vmatprep.subr.mxu0 0.0
    %99 = vmatpush1.msra.mxu0 0.0
    %100 = vmatprep.subr.mxu0 0.0
    %101 = vmatpush1.msra.mxu0 0.0
    %102 = vmatprep.subr.mxu0 0.0
    %103 = vmatpush1.msra.mxu0 0.0
    %104 = vmatprep.subr.mxu0 0.0
    %105 = vmatpush1.msra.mxu0 0.0
    %106 = vmatprep.subr.mxu0 0.0
    %107 = vmatpush1.msra.mxu0 0.0
    %108 = vmatprep.subr.mxu0 0.0
    %109 = vmatpush1.msra.mxu0 0.0
    %110 = vmatprep.subr.mxu0 0.0
    %111 = vmatpush1.msra.mxu0 0.0
    %112 = vmatprep.subr.mxu0 0.0
    %113 = vmatpush1.msra.mxu0 0.0
    %114 = vmatprep.subr.mxu0 0.0
    %115 = vmatpush1.msra.mxu0 0.0
    %116 = vmatprep.subr.mxu0 0.0
    %117 = vmatpush1.msra.mxu0 0.0
    %118 = vmatprep.subr.mxu0 0.0
    %119 = vmatpush1.msra.mxu0 0.0
    %120 = vmatprep.subr.mxu0 0.0
    %121 = vmatpush1.msra.mxu0 0.0
    %122 = vmatprep.subr.mxu0 0.0
    %123 = vmatpush1.msra.mxu0 %v45
    %124 = vmatprep.subr.mxu0 0.0
    %125 = vmatpush1.msra.mxu0 %v44
    %126 = vmatprep.subr.mxu0 0.0
    %127 = vmatpush1.msra.mxu0 %v43
    %128 = vmatprep.subr.mxu0 0.0
    %129 = vmatpush1.msra.mxu0 %v42
    %130 = vmatprep.subr.mxu0 0.0
    %131 = vmatpush2.msra.mxu0 0.0
    %132 = vmatprep.subr.mxu0 0.0
    %133 = vmatpush2.msra.mxu0 0.0
    %134 = vmatprep.subr.mxu0 0.0
    %135 = vmatpush2.msra.mxu0 0.0
    %136 = vmatprep.subr.mxu0 0.0
    %137 = vmatpush2.msra.mxu0 0.0
    %138 = vmatprep.subr.mxu0 0.0
    %139 = vmatpush2.msra.mxu0 0.0
    %140 = vmatprep.subr.mxu0 0.0
    %141 = vmatpush2.msra.mxu0 0.0
    %142 = vmatprep.subr.mxu0 0.0
    %143 = vmatpush2.msra.mxu0 0.0
    %144 = vmatprep.subr.mxu0 0.0
    %145 = vmatpush2.msra.mxu0 0.0
    %146 = vmatprep.subr.mxu0 0.0
    %147 = vmatpush2.msra.mxu0 0.0
    %148 = vmatprep.subr.mxu0 0.0
    %149 = vmatpush2.msra.mxu0 0.0
    %150 = vmatprep.subr.mxu0 0.0
    %151 = vmatpush2.msra.mxu0 0.0
    %152 = vmatprep.subr.mxu0 0.0
    %153 = vmatpush2.msra.mxu0 0.0
    %154 = vmatprep.subr.mxu0 0.0
    %155 = vmatpush2.msra.mxu0 0.0
    %156 = vmatprep.subr.mxu0 0.0
    %157 = vmatpush2.msra.mxu0 0.0
    %158 = vmatprep.subr.mxu0 0.0
    %159 = vmatpush2.msra.mxu0 0.0
    %160 = vmatprep.subr.mxu0 0.0
    %161 = vmatpush2.msra.mxu0 0.0
    %162 = vmatprep.mubr.f32.mxu0 0.0
    %163 = vmatmul.mubr.f32.gmra.mxu0 %v93
    %v164 = vpop.f32.mrf.mxu0
    %v165 = vadd.f32 %v91, %v164
    %v166 = vpop.f32.mrf.mxu0
    %167 = vmatprep.mubr.f32.mxu0 0.0
    %168 = vmatmul.mubr.f32.gmra.mxu0 %v96
    %v169 = vpop.f32.mrf.mxu0
    %v170 = vadd.f32 %v91, %v169
    %v171 = vpop.f32.mrf.mxu0
    %172 = vdwg.mxu0
    %174 = vrot.lane.b32.xlu0 %v165, 96
    %v175 = vpop.permute.xlu0 %174
    %vm176 = vcmask 64512
    %v177 = vsel %vm176, %v165, 0
    %v179 = vsel %vm176, %v175, 0
    %181 = vmatprep.subr.mxu0 0.0
    %182 = vmatpush1.xpose.msra.mxu0 0.0
    %183 = vmatprep.subr.mxu0 0.0
    %184 = vmatpush1.xpose.msra.mxu0 0.0
    %185 = vmatprep.subr.mxu0 0.0
    %186 = vmatpush1.xpose.msra.mxu0 0.0
    %187 = vmatprep.subr.mxu0 0.0
    %188 = vmatpush1.xpose.msra.mxu0 0.0
    %189 = vmatprep.subr.mxu0 0.0
    %190 = vmatpush1.xpose.msra.mxu0 0.0
    %191 = vmatprep.subr.mxu0 0.0
    %192 = vmatpush1.xpose.msra.mxu0 0.0
    %193 = vmatprep.subr.mxu0 0.0
    %194 = vmatpush1.xpose.msra.mxu0 0.0
    %195 = vmatprep.subr.mxu0 0.0
    %196 = vmatpush1.xpose.msra.mxu0 0.0
    %197 = vmatprep.subr.mxu0 0.0
    %198 = vmatpush1.xpose.msra.mxu0 0.0
    %199 = vmatprep.subr.mxu0 0.0
    %200 = vmatpush1.xpose.msra.mxu0 0.0
    %201 = vmatprep.subr.mxu0 0.0
    %202 = vmatpush1.xpose.msra.mxu0 0.0
    %203 = vmatprep.subr.mxu0 0.0
    %204 = vmatpush1.xpose.msra.mxu0 0.0
    %205 = vmatprep.subr.mxu0 0.0
    %206 = vmatpush1.xpose.msra.mxu0 0.0
    %207 = vmatprep.subr.mxu0 0.0
    %208 = vmatpush1.xpose.msra.mxu0 0.0
    %209 = vmatprep.subr.mxu0 0.0
    %210 = vmatpush1.xpose.msra.mxu0 0.0
    %211 = vmatprep.subr.mxu0 0.0
    %212 = vmatpush1.xpose.msra.mxu0 %v179
    %213 = vmatprep.subr.mxu0 0.0
    %214 = vmatpush2.xpose.msra.mxu0 0.0
    %215 = vmatprep.subr.mxu0 0.0
    %216 = vmatpush2.xpose.msra.mxu0 0.0
    %217 = vmatprep.subr.mxu0 0.0
    %218 = vmatpush2.xpose.msra.mxu0 0.0
    %219 = vmatprep.subr.mxu0 0.0
    %220 = vmatpush2.xpose.msra.mxu0 0.0
    %221 = vmatprep.subr.mxu0 0.0
    %222 = vmatpush2.xpose.msra.mxu0 0.0
    %223 = vmatprep.subr.mxu0 0.0
    %224 = vmatpush2.xpose.msra.mxu0 0.0
    %225 = vmatprep.subr.mxu0 0.0
    %226 = vmatpush2.xpose.msra.mxu0 0.0
    %227 = vmatprep.subr.mxu0 0.0
    %228 = vmatpush2.xpose.msra.mxu0 0.0
    %229 = vmatprep.subr.mxu0 0.0
    %230 = vmatpush2.xpose.msra.mxu0 0.0
    %231 = vmatprep.subr.mxu0 0.0
    %232 = vmatpush2.xpose.msra.mxu0 0.0
    %233 = vmatprep.subr.mxu0 0.0
    %234 = vmatpush2.xpose.msra.mxu0 0.0
    %235 = vmatprep.subr.mxu0 0.0
    %236 = vmatpush2.xpose.msra.mxu0 0.0
    %237 = vmatprep.subr.mxu0 0.0
    %238 = vmatpush2.xpose.msra.mxu0 0.0
    %239 = vmatprep.subr.mxu0 0.0
    %240 = vmatpush2.xpose.msra.mxu0 0.0
    %241 = vmatprep.subr.mxu0 0.0
    %242 = vmatpush2.xpose.msra.mxu0 0.0
    %243 = vmatprep.subr.mxu0 0.0
    %244 = vmatpush2.xpose.msra.mxu0 0.0
    %245 = vmatprep.mubr.f32.mxu0 0.0
    %246 = vmatmul.mubr.f32.gmra.mxu0 %v177
    %v247 = vpop.f32.mrf.mxu0
    %v248 = vadd.f32 0.0, %v247
    %v249 = vpop.f32.mrf.mxu0
    %250 = vdwg.mxu0
    %252 = vrot.lane.b32.xlu0 %v170, 96
    %v253 = vpop.permute.xlu0 %252
    %v254 = vsel %vm176, %v170, 0
    %v256 = vsel %vm176, %v253, 0
    %258 = vmatprep.subr.mxu0 0.0
    %259 = vmatpush1.xpose.msra.mxu0 0.0
    %260 = vmatprep.subr.mxu0 0.0
    %261 = vmatpush1.xpose.msra.mxu0 0.0
    %262 = vmatprep.subr.mxu0 0.0
    %263 = vmatpush1.xpose.msra.mxu0 0.0
    %264 = vmatprep.subr.mxu0 0.0
    %265 = vmatpush1.xpose.msra.mxu0 0.0
    %266 = vmatprep.subr.mxu0 0.0
    %267 = vmatpush1.xpose.msra.mxu0 0.0
    %268 = vmatprep.subr.mxu0 0.0
    %269 = vmatpush1.xpose.msra.mxu0 0.0
    %270 = vmatprep.subr.mxu0 0.0
    %271 = vmatpush1.xpose.msra.mxu0 0.0
    %272 = vmatprep.subr.mxu0 0.0
    %273 = vmatpush1.xpose.msra.mxu0 0.0
    %274 = vmatprep.subr.mxu0 0.0
    %275 = vmatpush1.xpose.msra.mxu0 0.0
    %276 = vmatprep.subr.mxu0 0.0
    %277 = vmatpush1.xpose.msra.mxu0 0.0
    %278 = vmatprep.subr.mxu0 0.0
    %279 = vmatpush1.xpose.msra.mxu0 0.0
    %280 = vmatprep.subr.mxu0 0.0
    %281 = vmatpush1.xpose.msra.mxu0 0.0
    %282 = vmatprep.subr.mxu0 0.0
    %283 = vmatpush1.xpose.msra.mxu0 0.0
    %284 = vmatprep.subr.mxu0 0.0
    %285 = vmatpush1.xpose.msra.mxu0 0.0
    %286 = vmatprep.subr.mxu0 0.0
    %287 = vmatpush1.xpose.msra.mxu0 0.0
    %288 = vmatprep.subr.mxu0 0.0
    %289 = vmatpush1.xpose.msra.mxu0 %v256
    %290 = vmatprep.subr.mxu0 0.0
    %291 = vmatpush2.xpose.msra.mxu0 0.0
    %292 = vmatprep.subr.mxu0 0.0
    %293 = vmatpush2.xpose.msra.mxu0 0.0
    %294 = vmatprep.subr.mxu0 0.0
    %295 = vmatpush2.xpose.msra.mxu0 0.0
    %296 = vmatprep.subr.mxu0 0.0
    %297 = vmatpush2.xpose.msra.mxu0 0.0
    %298 = vmatprep.subr.mxu0 0.0
    %299 = vmatpush2.xpose.msra.mxu0 0.0
    %300 = vmatprep.subr.mxu0 0.0
    %301 = vmatpush2.xpose.msra.mxu0 0.0
    %302 = vmatprep.subr.mxu0 0.0
    %303 = vmatpush2.xpose.msra.mxu0 0.0
    %304 = vmatprep.subr.mxu0 0.0
    %305 = vmatpush2.xpose.msra.mxu0 0.0
    %306 = vmatprep.subr.mxu0 0.0
    %307 = vmatpush2.xpose.msra.mxu0 0.0
    %308 = vmatprep.subr.mxu0 0.0
    %309 = vmatpush2.xpose.msra.mxu0 0.0
    %310 = vmatprep.subr.mxu0 0.0
    %311 = vmatpush2.xpose.msra.mxu0 0.0
    %312 = vmatprep.subr.mxu0 0.0
    %313 = vmatpush2.xpose.msra.mxu0 0.0
    %314 = vmatprep.subr.mxu0 0.0
    %315 = vmatpush2.xpose.msra.mxu0 0.0
    %316 = vmatprep.subr.mxu0 0.0
    %317 = vmatpush2.xpose.msra.mxu0 0.0
    %318 = vmatprep.subr.mxu0 0.0
    %319 = vmatpush2.xpose.msra.mxu0 0.0
    %320 = vmatprep.subr.mxu0 0.0
    %321 = vmatpush2.xpose.msra.mxu0 0.0
    %322 = vmatprep.mubr.f32.mxu0 0.0
    %323 = vmatmul.mubr.f32.gmra.mxu0 %v254
    %v324 = vpop.f32.mrf.mxu0
    %v325 = vadd.f32 0.0, %v324
    %v326 = vpop.f32.mrf.mxu0
    %327 = vdwg.mxu0
    %v328 = vsel %vm176, %v248, -inf
    %329 = vmax.xlane.f32.xlu0 %v328
    %v330 = vpop.xlane.xlu0 %329
    %v331 = vsel %vm176, %v325, -inf
    %332 = vmax.xlane.f32.xlu0 %v331
    %v333 = vpop.xlane.xlu0 %332
    %v334 = vsub.f32 %v248, %v330
    %v335 = vsub.f32 %v325, %v333
    %v336 = vmul.f32 %v334, 1.442695
    %v337 = vpow.pop %v336
    %v338 = vmul.f32 %v335, 1.442695
    %v339 = vpow.pop %v338
    %v340 = vsel %vm176, %v337, 0.0
    %341 = vadd.xlane.f32.xlu0 %v340
    %v342 = vpop.xlane.xlu0 %341
    %v343 = vsel %vm176, %v339, 0.0
    %344 = vadd.xlane.f32.xlu0 %v343
    %v345 = vpop.xlane.xlu0 %344
    %v346 = vrcp.pop %v342
    %v347 = vrcp.pop %v345
    %v348 = vmul.f32 %v337, %v346
    %v349 = vmul.f32 %v339, %v347
    %350 = vrot.lane.b32.xlu0 %v165, 64
    %v351 = vpop.permute.xlu0 %350
    %v354 = vsel %vm176, %v348, 0
    %356 = vmatprep.subr.mxu0 0.0
    %357 = vmatpush1.msra.mxu0 0.0
    %358 = vmatprep.subr.mxu0 0.0
    %359 = vmatpush1.msra.mxu0 0.0
    %360 = vmatprep.subr.mxu0 0.0
    %361 = vmatpush1.msra.mxu0 0.0
    %362 = vmatprep.subr.mxu0 0.0
    %363 = vmatpush1.msra.mxu0 0.0
    %364 = vmatprep.subr.mxu0 0.0
    %365 = vmatpush1.msra.mxu0 0.0
    %366 = vmatprep.subr.mxu0 0.0
    %367 = vmatpush1.msra.mxu0 0.0
    %368 = vmatprep.subr.mxu0 0.0
    %369 = vmatpush1.msra.mxu0 0.0
    %370 = vmatprep.subr.mxu0 0.0
    %371 = vmatpush1.msra.mxu0 0.0
    %372 = vmatprep.subr.mxu0 0.0
    %373 = vmatpush1.msra.mxu0 0.0
    %374 = vmatprep.subr.mxu0 0.0
    %375 = vmatpush1.msra.mxu0 0.0
    %376 = vmatprep.subr.mxu0 0.0
    %377 = vmatpush1.msra.mxu0 0.0
    %378 = vmatprep.subr.mxu0 0.0
    %379 = vmatpush1.msra.mxu0 0.0
    %380 = vmatprep.subr.mxu0 0.0
    %381 = vmatpush1.msra.mxu0 0.0
    %382 = vmatprep.subr.mxu0 0.0
    %383 = vmatpush1.msra.mxu0 0.0
    %384 = vmatprep.subr.mxu0 0.0
    %385 = vmatpush1.msra.mxu0 0.0
    %386 = vmatprep.subr.mxu0 0.0
    %387 = vmatpush1.msra.mxu0 %v351
    %388 = vmatprep.subr.mxu0 0.0
    %389 = vmatpush2.msra.mxu0 0.0
    %390 = vmatprep.subr.mxu0 0.0
    %391 = vmatpush2.msra.mxu0 0.0
    %392 = vmatprep.subr.mxu0 0.0
    %393 = vmatpush2.msra.mxu0 0.0
    %394 = vmatprep.subr.mxu0 0.0
    %395 = vmatpush2.msra.mxu0 0.0
    %396 = vmatprep.subr.mxu0 0.0
    %397 = vmatpush2.msra.mxu0 0.0
    %398 = vmatprep.subr.mxu0 0.0
    %399 = vmatpush2.msra.mxu0 0.0
    %400 = vmatprep.subr.mxu0 0.0
    %401 = vmatpush2.msra.mxu0 0.0
    %402 = vmatprep.subr.mxu0 0.0
    %403 = vmatpush2.msra.mxu0 0.0
    %404 = vmatprep.subr.mxu0 0.0
    %405 = vmatpush2.msra.mxu0 0.0
    %406 = vmatprep.subr.mxu0 0.0
    %407 = vmatpush2.msra.mxu0 0.0
    %408 = vmatprep.subr.mxu0 0.0
    %409 = vmatpush2.msra.mxu0 0.0
    %410 = vmatprep.subr.mxu0 0.0
    %411 = vmatpush2.msra.mxu0 0.0
    %412 = vmatprep.subr.mxu0 0.0
    %413 = vmatpush2.msra.mxu0 0.0
    %414 = vmatprep.subr.mxu0 0.0
    %415 = vmatpush2.msra.mxu0 0.0
    %416 = vmatprep.subr.mxu0 0.0
    %417 = vmatpush2.msra.mxu0 0.0
    %418 = vmatprep.subr.mxu0 0.0
    %419 = vmatpush2.msra.mxu0 0.0
    %420 = vmatprep.mubr.f32.mxu0 0.0
    %421 = vmatmul.mubr.f32.gmra.mxu0 %v354
    %v422 = vpop.f32.mrf.mxu0
    %v423 = vadd.f32 0.0, %v422
    %v424 = vpop.f32.mrf.mxu0
    %425 = vdwg.mxu0
    %426 = vrot.lane.b32.xlu0 %v170, 64
    %v427 = vpop.permute.xlu0 %426
    %v430 = vsel %vm176, %v349, 0
    %432 = vmatprep.subr.mxu0 0.0
    %433 = vmatpush1.msra.mxu0 0.0
    %434 = vmatprep.subr.mxu0 0.0
    %435 = vmatpush1.msra.mxu0 0.0
    %436 = vmatprep.subr.mxu0 0.0
    %437 = vmatpush1.msra.mxu0 0.0
    %438 = vmatprep.subr.mxu0 0.0
    %439 = vmatpush1.msra.mxu0 0.0
    %440 = vmatprep.subr.mxu0 0.0
    %441 = vmatpush1.msra.mxu0 0.0
    %442 = vmatprep.subr.mxu0 0.0
    %443 = vmatpush1.msra.mxu0 0.0
    %444 = vmatprep.subr.mxu0 0.0
    %445 = vmatpush1.msra.mxu0 0.0
    %446 = vmatprep.subr.mxu0 0.0
    %447 = vmatpush1.msra.mxu0 0.0
    %448 = vmatprep.subr.mxu0 0.0
    %449 = vmatpush1.msra.mxu0 0.0
    %450 = vmatprep.subr.mxu0 0.0
    %451 = vmatpush1.msra.mxu0 0.0
    %452 = vmatprep.subr.mxu0 0.0
    %453 = vmatpush1.msra.mxu0 0.0
    %454 = vmatprep.subr.mxu0 0.0
    %455 = vmatpush1.msra.mxu0 0.0
    %456 = vmatprep.subr.mxu0 0.0
    %457 = vmatpush1.msra.mxu0 0.0
    %458 = vmatprep.subr.mxu0 0.0
    %459 = vmatpush1.msra.mxu0 0.0
    %460 = vmatprep.subr.mxu0 0.0
    %461 = vmatpush1.msra.mxu0 0.0
    %462 = vmatprep.subr.mxu0 0.0
    %463 = vmatpush1.msra.mxu0 %v427
    %464 = vmatprep.subr.mxu0 0.0
    %465 = vmatpush2.msra.mxu0 0.0
    %466 = vmatprep.subr.mxu0 0.0
    %467 = vmatpush2.msra.mxu0 0.0
    %468 = vmatprep.subr.mxu0 0.0
    %469 = vmatpush2.msra.mxu0 0.0
    %470 = vmatprep.subr.mxu0 0.0
    %471 = vmatpush2.msra.mxu0 0.0
    %472 = vmatprep.subr.mxu0 0.0
    %473 = vmatpush2.msra.mxu0 0.0
    %474 = vmatprep.subr.mxu0 0.0
    %475 = vmatpush2.msra.mxu0 0.0
    %476 = vmatprep.subr.mxu0 0.0
    %477 = vmatpush2.msra.mxu0 0.0
    %478 = vmatprep.subr.mxu0 0.0
    %479 = vmatpush2.msra.mxu0 0.0
    %480 = vmatprep.subr.mxu0 0.0
    %481 = vmatpush2.msra.mxu0 0.0
    %482 = vmatprep.subr.mxu0 0.0
    %483 = vmatpush2.msra.mxu0 0.0
    %484 = vmatprep.subr.mxu0 0.0
    %485 = vmatpush2.msra.mxu0 0.0
    %486 = vmatprep.subr.mxu0 0.0
    %487 = vmatpush2.msra.mxu0 0.0
    %488 = vmatprep.subr.mxu0 0.0
    %489 = vmatpush2.msra.mxu0 0.0
    %490 = vmatprep.subr.mxu0 0.0
    %491 = vmatpush2.msra.mxu0 0.0
    %492 = vmatprep.subr.mxu0 0.0
    %493 = vmatpush2.msra.mxu0 0.0
    %494 = vmatprep.subr.mxu0 0.0
    %495 = vmatpush2.msra.mxu0 0.0
    %496 = vmatprep.mubr.f32.mxu0 0.0
    %497 = vmatmul.mubr.f32.gmra.mxu0 %v430
    %v498 = vpop.f32.mrf.mxu0
    %v499 = vadd.f32 0.0, %v498
    %v500 = vpop.f32.mrf.mxu0
    %501 = vdwg.mxu0
    %502 = vrot.lane.b32.xlu0 %v165, 120
    %v503 = vpop.permute.xlu0 %502
    %504 = vrot.lane.b32.xlu0 %v165, 88
    %v505 = vpop.permute.xlu0 %504
    %v506 = vsel %vm176, %v503, 0
    %v508 = vsel %vm176, %v505, 0
    %510 = vmatprep.subr.mxu0 0.0
    %511 = vmatpush1.xpose.msra.mxu0 0.0
    %512 = vmatprep.subr.mxu0 0.0
    %513 = vmatpush1.xpose.msra.mxu0 0.0
    %514 = vmatprep.subr.mxu0 0.0
    %515 = vmatpush1.xpose.msra.mxu0 0.0
    %516 = vmatprep.subr.mxu0 0.0
    %517 = vmatpush1.xpose.msra.mxu0 0.0
    %518 = vmatprep.subr.mxu0 0.0
    %519 = vmatpush1.xpose.msra.mxu0 0.0
    %520 = vmatprep.subr.mxu0 0.0
    %521 = vmatpush1.xpose.msra.mxu0 0.0
    %522 = vmatprep.subr.mxu0 0.0
    %523 = vmatpush1.xpose.msra.mxu0 0.0
    %524 = vmatprep.subr.mxu0 0.0
    %525 = vmatpush1.xpose.msra.mxu0 0.0
    %526 = vmatprep.subr.mxu0 0.0
    %527 = vmatpush1.xpose.msra.mxu0 0.0
    %528 = vmatprep.subr.mxu0 0.0
    %529 = vmatpush1.xpose.msra.mxu0 0.0
    %530 = vmatprep.subr.mxu0 0.0
    %531 = vmatpush1.xpose.msra.mxu0 0.0
    %532 = vmatprep.subr.mxu0 0.0
    %533 = vmatpush1.xpose.msra.mxu0 0.0
    %534 = vmatprep.subr.mxu0 0.0
    %535 = vmatpush1.xpose.msra.mxu0 0.0
    %536 = vmatprep.subr.mxu0 0.0
    %537 = vmatpush1.xpose.msra.mxu0 0.0
    %538 = vmatprep.subr.mxu0 0.0
    %539 = vmatpush1.xpose.msra.mxu0 0.0
    %540 = vmatprep.subr.mxu0 0.0
    %541 = vmatpush1.xpose.msra.mxu0 %v508
    %542 = vmatprep.subr.mxu0 0.0
    %543 = vmatpush2.xpose.msra.mxu0 0.0
    %544 = vmatprep.subr.mxu0 0.0
    %545 = vmatpush2.xpose.msra.mxu0 0.0
    %546 = vmatprep.subr.mxu0 0.0
    %547 = vmatpush2.xpose.msra.mxu0 0.0
    %548 = vmatprep.subr.mxu0 0.0
    %549 = vmatpush2.xpose.msra.mxu0 0.0
    %550 = vmatprep.subr.mxu0 0.0
    %551 = vmatpush2.xpose.msra.mxu0 0.0
    %552 = vmatprep.subr.mxu0 0.0
    %553 = vmatpush2.xpose.msra.mxu0 0.0
    %554 = vmatprep.subr.mxu0 0.0
    %555 = vmatpush2.xpose.msra.mxu0 0.0
    %556 = vmatprep.subr.mxu0 0.0
    %557 = vmatpush2.xpose.msra.mxu0 0.0
    %558 = vmatprep.subr.mxu0 0.0
    %559 = vmatpush2.xpose.msra.mxu0 0.0
    %560 = vmatprep.subr.mxu0 0.0
    %561 = vmatpush2.xpose.msra.mxu0 0.0
    %562 = vmatprep.subr.mxu0 0.0
    %563 = vmatpush2.xpose.msra.mxu0 0.0
    %564 = vmatprep.subr.mxu0 0.0
    %565 = vmatpush2.xpose.msra.mxu0 0.0
    %566 = vmatprep.subr.mxu0 0.0
    %567 = vmatpush2.xpose.msra.mxu0 0.0
    %568 = vmatprep.subr.mxu0 0.0
    %569 = vmatpush2.xpose.msra.mxu0 0.0
    %570 = vmatprep.subr.mxu0 0.0
    %571 = vmatpush2.xpose.msra.mxu0 0.0
    %572 = vmatprep.subr.mxu0 0.0
    %573 = vmatpush2.xpose.msra.mxu0 0.0
    %574 = vmatprep.mubr.f32.mxu0 0.0
    %575 = vmatmul.mubr.f32.gmra.mxu0 %v506
    %v576 = vpop.f32.mrf.mxu0
    %v577 = vadd.f32 0.0, %v576
    %v578 = vpop.f32.mrf.mxu0
    %579 = vdwg.mxu0
    %580 = vrot.lane.b32.xlu0 %v170, 120
    %v581 = vpop.permute.xlu0 %580
    %582 = vrot.lane.b32.xlu0 %v170, 88
    %v583 = vpop.permute.xlu0 %582
    %v584 = vsel %vm176, %v581, 0
    %v586 = vsel %vm176, %v583, 0
    %588 = vmatprep.subr.mxu0 0.0
    %589 = vmatpush1.xpose.msra.mxu0 0.0
    %590 = vmatprep.subr.mxu0 0.0
    %591 = vmatpush1.xpose.msra.mxu0 0.0
    %592 = vmatprep.subr.mxu0 0.0
    %593 = vmatpush1.xpose.msra.mxu0 0.0
    %594 = vmatprep.subr.mxu0 0.0
    %595 = vmatpush1.xpose.msra.mxu0 0.0
    %596 = vmatprep.subr.mxu0 0.0
    %597 = vmatpush1.xpose.msra.mxu0 0.0
    %598 = vmatprep.subr.mxu0 0.0
    %599 = vmatpush1.xpose.msra.mxu0 0.0
    %600 = vmatprep.subr.mxu0 0.0
    %601 = vmatpush1.xpose.msra.mxu0 0.0
    %602 = vmatprep.subr.mxu0 0.0
    %603 = vmatpush1.xpose.msra.mxu0 0.0
    %604 = vmatprep.subr.mxu0 0.0
    %605 = vmatpush1.xpose.msra.mxu0 0.0
    %606 = vmatprep.subr.mxu0 0.0
    %607 = vmatpush1.xpose.msra.mxu0 0.0
    %608 = vmatprep.subr.mxu0 0.0
    %609 = vmatpush1.xpose.msra.mxu0 0.0
    %610 = vmatprep.subr.mxu0 0.0
    %611 = vmatpush1.xpose.msra.mxu0 0.0
    %612 = vmatprep.subr.mxu0 0.0
    %613 = vmatpush1.xpose.msra.mxu0 0.0
    %614 = vmatprep.subr.mxu0 0.0
    %615 = vmatpush1.xpose.msra.mxu0 0.0
    %616 = vmatprep.subr.mxu0 0.0
    %617 = vmatpush1.xpose.msra.mxu0 0.0
    %618 = vmatprep.subr.mxu0 0.0
    %619 = vmatpush1.xpose.msra.mxu0 %v586
    %620 = vmatprep.subr.mxu0 0.0
    %621 = vmatpush2.xpose.msra.mxu0 0.0
    %622 = vmatprep.subr.mxu0 0.0
    %623 = vmatpush2.xpose.msra.mxu0 0.0
    %624 = vmatprep.subr.mxu0 0.0
    %625 = vmatpush2.xpose.msra.mxu0 0.0
    %626 = vmatprep.subr.mxu0 0.0
    %627 = vmatpush2.xpose.msra.mxu0 0.0
    %628 = vmatprep.subr.mxu0 0.0
    %629 = vmatpush2.xpose.msra.mxu0 0.0
    %630 = vmatprep.subr.mxu0 0.0
    %631 = vmatpush2.xpose.msra.mxu0 0.0
    %632 = vmatprep.subr.mxu0 0.0
    %633 = vmatpush2.xpose.msra.mxu0 0.0
    %634 = vmatprep.subr.mxu0 0.0
    %635 = vmatpush2.xpose.msra.mxu0 0.0
    %636 = vmatprep.subr.mxu0 0.0
    %637 = vmatpush2.xpose.msra.mxu0 0.0
    %638 = vmatprep.subr.mxu0 0.0
    %639 = vmatpush2.xpose.msra.mxu0 0.0
    %640 = vmatprep.subr.mxu0 0.0
    %641 = vmatpush2.xpose.msra.mxu0 0.0
    %642 = vmatprep.subr.mxu0 0.0
    %643 = vmatpush2.xpose.msra.mxu0 0.0
    %644 = vmatprep.subr.mxu0 0.0
    %645 = vmatpush2.xpose.msra.mxu0 0.0
    %646 = vmatprep.subr.mxu0 0.0
    %647 = vmatpush2.xpose.msra.mxu0 0.0
    %648 = vmatprep.subr.mxu0 0.0
    %649 = vmatpush2.xpose.msra.mxu0 0.0
    %650 = vmatprep.subr.mxu0 0.0
    %651 = vmatpush2.xpose.msra.mxu0 0.0
    %652 = vmatprep.mubr.f32.mxu0 0.0
    %653 = vmatmul.mubr.f32.gmra.mxu0 %v584
    %v654 = vpop.f32.mrf.mxu0
    %v655 = vadd.f32 0.0, %v654
    %v656 = vpop.f32.mrf.mxu0
    %657 = vdwg.mxu0
    %v658 = vsel %vm176, %v577, -inf
    %659 = vmax.xlane.f32.xlu0 %v658
    %v660 = vpop.xlane.xlu0 %659
    %v661 = vsel %vm176, %v655, -inf
    %662 = vmax.xlane.f32.xlu0 %v661
    %v663 = vpop.xlane.xlu0 %662
    %v664 = vsub.f32 %v577, %v660
    %v665 = vsub.f32 %v655, %v663
    %v666 = vmul.f32 %v664, 1.442695
    %v667 = vpow.pop %v666
    %v668 = vmul.f32 %v665, 1.442695
    %v669 = vpow.pop %v668
    %v670 = vsel %vm176, %v667, 0.0
    %671 = vadd.xlane.f32.xlu0 %v670
    %v672 = vpop.xlane.xlu0 %671
    %v673 = vsel %vm176, %v669, 0.0
    %674 = vadd.xlane.f32.xlu0 %v673
    %v675 = vpop.xlane.xlu0 %674
    %v676 = vrcp.pop %v672
    %v677 = vrcp.pop %v675
    %v678 = vmul.f32 %v667, %v676
    %v679 = vmul.f32 %v669, %v677
    %680 = vrot.lane.b32.xlu0 %v165, 56
    %v681 = vpop.permute.xlu0 %680
    %v684 = vsel %vm176, %v678, 0
    %686 = vmatprep.subr.mxu0 0.0
    %687 = vmatpush1.msra.mxu0 0.0
    %688 = vmatprep.subr.mxu0 0.0
    %689 = vmatpush1.msra.mxu0 0.0
    %690 = vmatprep.subr.mxu0 0.0
    %691 = vmatpush1.msra.mxu0 0.0
    %692 = vmatprep.subr.mxu0 0.0
    %693 = vmatpush1.msra.mxu0 0.0
    %694 = vmatprep.subr.mxu0 0.0
    %695 = vmatpush1.msra.mxu0 0.0
    %696 = vmatprep.subr.mxu0 0.0
    %697 = vmatpush1.msra.mxu0 0.0
    %698 = vmatprep.subr.mxu0 0.0
    %699 = vmatpush1.msra.mxu0 0.0
    %700 = vmatprep.subr.mxu0 0.0
    %701 = vmatpush1.msra.mxu0 0.0
    %702 = vmatprep.subr.mxu0 0.0
    %703 = vmatpush1.msra.mxu0 0.0
    %704 = vmatprep.subr.mxu0 0.0
    %705 = vmatpush1.msra.mxu0 0.0
    %706 = vmatprep.subr.mxu0 0.0
    %707 = vmatpush1.msra.mxu0 0.0
    %708 = vmatprep.subr.mxu0 0.0
    %709 = vmatpush1.msra.mxu0 0.0
    %710 = vmatprep.subr.mxu0 0.0
    %711 = vmatpush1.msra.mxu0 0.0
    %712 = vmatprep.subr.mxu0 0.0
    %713 = vmatpush1.msra.mxu0 0.0
    %714 = vmatprep.subr.mxu0 0.0
    %715 = vmatpush1.msra.mxu0 0.0
    %716 = vmatprep.subr.mxu0 0.0
    %717 = vmatpush1.msra.mxu0 %v681
    %718 = vmatprep.subr.mxu0 0.0
    %719 = vmatpush2.msra.mxu0 0.0
    %720 = vmatprep.subr.mxu0 0.0
    %721 = vmatpush2.msra.mxu0 0.0
    %722 = vmatprep.subr.mxu0 0.0
    %723 = vmatpush2.msra.mxu0 0.0
    %724 = vmatprep.subr.mxu0 0.0
    %725 = vmatpush2.msra.mxu0 0.0
    %726 = vmatprep.subr.mxu0 0.0
    %727 = vmatpush2.msra.mxu0 0.0
    %728 = vmatprep.subr.mxu0 0.0
    %729 = vmatpush2.msra.mxu0 0.0
    %730 = vmatprep.subr.mxu0 0.0
    %731 = vmatpush2.msra.mxu0 0.0
    %732 = vmatprep.subr.mxu0 0.0
    %733 = vmatpush2.msra.mxu0 0.0
    %734 = vmatprep.subr.mxu0 0.0
    %735 = vmatpush2.msra.mxu0 0.0
    %736 = vmatprep.subr.mxu0 0.0
    %737 = vmatpush2.msra.mxu0 0.0
    %738 = vmatprep.subr.mxu0 0.0
    %739 = vmatpush2.msra.mxu0 0.0
    %740 = vmatprep.subr.mxu0 0.0
    %741 = vmatpush2.msra.mxu0 0.0
    %742 = vmatprep.subr.mxu0 0.0
    %743 = vmatpush2.msra.mxu0 0.0
    %744 = vmatprep.subr.mxu0 0.0
    %745 = vmatpush2.msra.mxu0 0.0
    %746 = vmatprep.subr.mxu0 0.0
    %747 = vmatpush2.msra.mxu0 0.0
    %748 = vmatprep.subr.mxu0 0.0
    %749 = vmatpush2.msra.mxu0 0.0
    %750 = vmatprep.mubr.f32.mxu0 0.0
    %751 = vmatmul.mubr.f32.gmra.mxu0 %v684
    %v752 = vpop.f32.mrf.mxu0
    %v753 = vadd.f32 0.0, %v752
    %v754 = vpop.f32.mrf.mxu0
    %755 = vdwg.mxu0
    %756 = vrot.lane.b32.xlu0 %v170, 56
    %v757 = vpop.permute.xlu0 %756
    %v760 = vsel %vm176, %v679, 0
    %762 = vmatprep.subr.mxu0 0.0
    %763 = vmatpush1.msra.mxu0 0.0
    %764 = vmatprep.subr.mxu0 0.0
    %765 = vmatpush1.msra.mxu0 0.0
    %766 = vmatprep.subr.mxu0 0.0
    %767 = vmatpush1.msra.mxu0 0.0
    %768 = vmatprep.subr.mxu0 0.0
    %769 = vmatpush1.msra.mxu0 0.0
    %770 = vmatprep.subr.mxu0 0.0
    %771 = vmatpush1.msra.mxu0 0.0
    %772 = vmatprep.subr.mxu0 0.0
    %773 = vmatpush1.msra.mxu0 0.0
    %774 = vmatprep.subr.mxu0 0.0
    %775 = vmatpush1.msra.mxu0 0.0
    %776 = vmatprep.subr.mxu0 0.0
    %777 = vmatpush1.msra.mxu0 0.0
    %778 = vmatprep.subr.mxu0 0.0
    %779 = vmatpush1.msra.mxu0 0.0
    %780 = vmatprep.subr.mxu0 0.0
    %781 = vmatpush1.msra.mxu0 0.0
    %782 = vmatprep.subr.mxu0 0.0
    %783 = vmatpush1.msra.mxu0 0.0
    %784 = vmatprep.subr.mxu0 0.0
    %785 = vmatpush1.msra.mxu0 0.0
    %786 = vmatprep.subr.mxu0 0.0
    %787 = vmatpush1.msra.mxu0 0.0
    %788 = vmatprep.subr.mxu0 0.0
    %789 = vmatpush1.msra.mxu0 0.0
    %790 = vmatprep.subr.mxu0 0.0
    %791 = vmatpush1.msra.mxu0 0.0
    %792 = vmatprep.subr.mxu0 0.0
    %793 = vmatpush1.msra.mxu0 %v757
    %794 = vmatprep.subr.mxu0 0.0
    %795 = vmatpush2.msra.mxu0 0.0
    %796 = vmatprep.subr.mxu0 0.0
    %797 = vmatpush2.msra.mxu0 0.0
    %798 = vmatprep.subr.mxu0 0.0
    %799 = vmatpush2.msra.mxu0 0.0
    %800 = vmatprep.subr.mxu0 0.0
    %801 = vmatpush2.msra.mxu0 0.0
    %802 = vmatprep.subr.mxu0 0.0
    %803 = vmatpush2.msra.mxu0 0.0
    %804 = vmatprep.subr.mxu0 0.0
    %805 = vmatpush2.msra.mxu0 0.0
    %806 = vmatprep.subr.mxu0 0.0
    %807 = vmatpush2.msra.mxu0 0.0
    %808 = vmatprep.subr.mxu0 0.0
    %809 = vmatpush2.msra.mxu0 0.0
    %810 = vmatprep.subr.mxu0 0.0
    %811 = vmatpush2.msra.mxu0 0.0
    %812 = vmatprep.subr.mxu0 0.0
    %813 = vmatpush2.msra.mxu0 0.0
    %814 = vmatprep.subr.mxu0 0.0
    %815 = vmatpush2.msra.mxu0 0.0
    %816 = vmatprep.subr.mxu0 0.0
    %817 = vmatpush2.msra.mxu0 0.0
    %818 = vmatprep.subr.mxu0 0.0
    %819 = vmatpush2.msra.mxu0 0.0
    %820 = vmatprep.subr.mxu0 0.0
    %821 = vmatpush2.msra.mxu0 0.0
    %822 = vmatprep.subr.mxu0 0.0
    %823 = vmatpush2.msra.mxu0 0.0
    %824 = vmatprep.subr.mxu0 0.0
    %825 = vmatpush2.msra.mxu0 0.0
    %826 = vmatprep.mubr.f32.mxu0 0.0
    %827 = vmatmul.mubr.f32.gmra.mxu0 %v760
    %v828 = vpop.f32.mrf.mxu0
    %v829 = vadd.f32 0.0, %v828
    %v830 = vpop.f32.mrf.mxu0
    %831 = vdwg.mxu0
    %833 = vrot.lane.b32.xlu0 %v43, 32
    %v834 = vpop.permute.xlu0 %833
    %v837 = vsel %vm176, %v753, 0
    %v840 = vsel %vm176, %v829, 0
    %842 = vmatprep.subr.mxu0 0.0
    %843 = vmatpush1.msra.mxu0 0.0
    %844 = vmatprep.subr.mxu0 0.0
    %845 = vmatpush1.msra.mxu0 0.0
    %846 = vmatprep.subr.mxu0 0.0
    %847 = vmatpush1.msra.mxu0 0.0
    %848 = vmatprep.subr.mxu0 0.0
    %849 = vmatpush1.msra.mxu0 0.0
    %850 = vmatprep.subr.mxu0 0.0
    %851 = vmatpush1.msra.mxu0 0.0
    %852 = vmatprep.subr.mxu0 0.0
    %853 = vmatpush1.msra.mxu0 0.0
    %854 = vmatprep.subr.mxu0 0.0
    %855 = vmatpush1.msra.mxu0 0.0
    %856 = vmatprep.subr.mxu0 0.0
    %857 = vmatpush1.msra.mxu0 0.0
    %858 = vmatprep.subr.mxu0 0.0
    %859 = vmatpush1.msra.mxu0 0.0
    %860 = vmatprep.subr.mxu0 0.0
    %861 = vmatpush1.msra.mxu0 0.0
    %862 = vmatprep.subr.mxu0 0.0
    %863 = vmatpush1.msra.mxu0 0.0
    %864 = vmatprep.subr.mxu0 0.0
    %865 = vmatpush1.msra.mxu0 0.0
    %866 = vmatprep.subr.mxu0 0.0
    %867 = vmatpush1.msra.mxu0 0.0
    %868 = vmatprep.subr.mxu0 0.0
    %869 = vmatpush1.msra.mxu0 0.0
    %870 = vmatprep.subr.mxu0 0.0
    %871 = vmatpush1.msra.mxu0 0.0
    %872 = vmatprep.subr.mxu0 0.0
    %873 = vmatpush1.msra.mxu0 %v834
    %874 = vmatprep.subr.mxu0 0.0
    %875 = vmatpush2.msra.mxu0 0.0
    %876 = vmatprep.subr.mxu0 0.0
    %877 = vmatpush2.msra.mxu0 0.0
    %878 = vmatprep.subr.mxu0 0.0
    %879 = vmatpush2.msra.mxu0 0.0
    %880 = vmatprep.subr.mxu0 0.0
    %881 = vmatpush2.msra.mxu0 0.0
    %882 = vmatprep.subr.mxu0 0.0
    %883 = vmatpush2.msra.mxu0 0.0
    %884 = vmatprep.subr.mxu0 0.0
    %885 = vmatpush2.msra.mxu0 0.0
    %886 = vmatprep.subr.mxu0 0.0
    %887 = vmatpush2.msra.mxu0 0.0
    %888 = vmatprep.subr.mxu0 0.0
    %889 = vmatpush2.msra.mxu0 0.0
    %890 = vmatprep.subr.mxu0 0.0
    %891 = vmatpush2.msra.mxu0 0.0
    %892 = vmatprep.subr.mxu0 0.0
    %893 = vmatpush2.msra.mxu0 0.0
    %894 = vmatprep.subr.mxu0 0.0
    %895 = vmatpush2.msra.mxu0 0.0
    %896 = vmatprep.subr.mxu0 0.0
    %897 = vmatpush2.msra.mxu0 0.0
    %898 = vmatprep.subr.mxu0 0.0
    %899 = vmatpush2.msra.mxu0 0.0
    %900 = vmatprep.subr.mxu0 0.0
    %901 = vmatpush2.msra.mxu0 0.0
    %902 = vmatprep.subr.mxu0 0.0
    %903 = vmatpush2.msra.mxu0 0.0
    %904 = vmatprep.subr.mxu0 0.0
    %905 = vmatpush2.msra.mxu0 0.0
    %906 = vmatprep.mubr.f32.mxu0 0.0
    %907 = vmatmul.mubr.f32.gmra.mxu0 %v837
    %v908 = vpop.f32.mrf.mxu0
    %v909 = vadd.f32 0.0, %v908
    %v910 = vpop.f32.mrf.mxu0
    %911 = vmatprep.mubr.f32.mxu0 0.0
    %912 = vmatmul.mubr.f32.gmra.mxu0 %v840
    %v913 = vpop.f32.mrf.mxu0
    %v914 = vadd.f32 0.0, %v913
    %v915 = vpop.f32.mrf.mxu0
    %916 = vdwg.mxu0
    %918 = vrot.lane.b32.xlu0 %v42, 32
    %v919 = vpop.permute.xlu0 %918
    %v922 = vsel %vm176, %v423, 0
    %v925 = vsel %vm176, %v499, 0
    %927 = vmatprep.subr.mxu0 0.0
    %928 = vmatpush1.msra.mxu0 0.0
    %929 = vmatprep.subr.mxu0 0.0
    %930 = vmatpush1.msra.mxu0 0.0
    %931 = vmatprep.subr.mxu0 0.0
    %932 = vmatpush1.msra.mxu0 0.0
    %933 = vmatprep.subr.mxu0 0.0
    %934 = vmatpush1.msra.mxu0 0.0
    %935 = vmatprep.subr.mxu0 0.0
    %936 = vmatpush1.msra.mxu0 0.0
    %937 = vmatprep.subr.mxu0 0.0
    %938 = vmatpush1.msra.mxu0 0.0
    %939 = vmatprep.subr.mxu0 0.0
    %940 = vmatpush1.msra.mxu0 0.0
    %941 = vmatprep.subr.mxu0 0.0
    %942 = vmatpush1.msra.mxu0 0.0
    %943 = vmatprep.subr.mxu0 0.0
    %944 = vmatpush1.msra.mxu0 0.0
    %945 = vmatprep.subr.mxu0 0.0
    %946 = vmatpush1.msra.mxu0 0.0
    %947 = vmatprep.subr.mxu0 0.0
    %948 = vmatpush1.msra.mxu0 0.0
    %949 = vmatprep.subr.mxu0 0.0
    %950 = vmatpush1.msra.mxu0 0.0
    %951 = vmatprep.subr.mxu0 0.0
    %952 = vmatpush1.msra.mxu0 0.0
    %953 = vmatprep.subr.mxu0 0.0
    %954 = vmatpush1.msra.mxu0 0.0
    %955 = vmatprep.subr.mxu0 0.0
    %956 = vmatpush1.msra.mxu0 0.0
    %957 = vmatprep.subr.mxu0 0.0
    %958 = vmatpush1.msra.mxu0 %v919
    %959 = vmatprep.subr.mxu0 0.0
    %960 = vmatpush2.msra.mxu0 0.0
    %961 = vmatprep.subr.mxu0 0.0
    %962 = vmatpush2.msra.mxu0 0.0
    %963 = vmatprep.subr.mxu0 0.0
    %964 = vmatpush2.msra.mxu0 0.0
    %965 = vmatprep.subr.mxu0 0.0
    %966 = vmatpush2.msra.mxu0 0.0
    %967 = vmatprep.subr.mxu0 0.0
    %968 = vmatpush2.msra.mxu0 0.0
    %969 = vmatprep.subr.mxu0 0.0
    %970 = vmatpush2.msra.mxu0 0.0
    %971 = vmatprep.subr.mxu0 0.0
    %972 = vmatpush2.msra.mxu0 0.0
    %973 = vmatprep.subr.mxu0 0.0
    %974 = vmatpush2.msra.mxu0 0.0
    %975 = vmatprep.subr.mxu0 0.0
    %976 = vmatpush2.msra.mxu0 0.0
    %977 = vmatprep.subr.mxu0 0.0
    %978 = vmatpush2.msra.mxu0 0.0
    %979 = vmatprep.subr.mxu0 0.0
    %980 = vmatpush2.msra.mxu0 0.0
    %981 = vmatprep.subr.mxu0 0.0
    %982 = vmatpush2.msra.mxu0 0.0
    %983 = vmatprep.subr.mxu0 0.0
    %984 = vmatpush2.msra.mxu0 0.0
    %985 = vmatprep.subr.mxu0 0.0
    %986 = vmatpush2.msra.mxu0 0.0
    %987 = vmatprep.subr.mxu0 0.0
    %988 = vmatpush2.msra.mxu0 0.0
    %989 = vmatprep.subr.mxu0 0.0
    %990 = vmatpush2.msra.mxu0 0.0
    %991 = vmatprep.mubr.f32.mxu0 0.0
    %992 = vmatmul.mubr.f32.gmra.mxu0 %v922
    %v993 = vpop.f32.mrf.mxu0
    %v994 = vadd.f32 %v909, %v993
    %v995 = vpop.f32.mrf.mxu0
    %996 = vmatprep.mubr.f32.mxu0 0.0
    %997 = vmatmul.mubr.f32.gmra.mxu0 %v925
    %v998 = vpop.f32.mrf.mxu0
    %v999 = vadd.f32 %v914, %v998
    %v1000 = vpop.f32.mrf.mxu0
    %1001 = vdwg.mxu0
    %1002 = vrot.lane.b32.xlu0 %v165, 112
    %v1003 = vpop.permute.xlu0 %1002
    %1004 = vrot.lane.b32.xlu0 %v165, 80
    %v1005 = vpop.permute.xlu0 %1004
    %v1006 = vsel %vm176, %v1003, 0
    %v1008 = vsel %vm176, %v1005, 0
    %1010 = vmatprep.subr.mxu0 0.0
    %1011 = vmatpush1.xpose.msra.mxu0 0.0
    %1012 = vmatprep.subr.mxu0 0.0
    %1013 = vmatpush1.xpose.msra.mxu0 0.0
    %1014 = vmatprep.subr.mxu0 0.0
    %1015 = vmatpush1.xpose.msra.mxu0 0.0
    %1016 = vmatprep.subr.mxu0 0.0
    %1017 = vmatpush1.xpose.msra.mxu0 0.0
    %1018 = vmatprep.subr.mxu0 0.0
    %1019 = vmatpush1.xpose.msra.mxu0 0.0
    %1020 = vmatprep.subr.mxu0 0.0
    %1021 = vmatpush1.xpose.msra.mxu0 0.0
    %1022 = vmatprep.subr.mxu0 0.0
    %1023 = vmatpush1.xpose.msra.mxu0 0.0
    %1024 = vmatprep.subr.mxu0 0.0
    %1025 = vmatpush1.xpose.msra.mxu0 0.0
    %1026 = vmatprep.subr.mxu0 0.0
    %1027 = vmatpush1.xpose.msra.mxu0 0.0
    %1028 = vmatprep.subr.mxu0 0.0
    %1029 = vmatpush1.xpose.msra.mxu0 0.0
    %1030 = vmatprep.subr.mxu0 0.0
    %1031 = vmatpush1.xpose.msra.mxu0 0.0
    %1032 = vmatprep.subr.mxu0 0.0
    %1033 = vmatpush1.xpose.msra.mxu0 0.0
    %1034 = vmatprep.subr.mxu0 0.0
    %1035 = vmatpush1.xpose.msra.mxu0 0.0
    %1036 = vmatprep.subr.mxu0 0.0
    %1037 = vmatpush1.xpose.msra.mxu0 0.0
    %1038 = vmatprep.subr.mxu0 0.0
    %1039 = vmatpush1.xpose.msra.mxu0 0.0
    %1040 = vmatprep.subr.mxu0 0.0
    %1041 = vmatpush1.xpose.msra.mxu0 %v1008
    %1042 = vmatprep.subr.mxu0 0.0
    %1043 = vmatpush2.xpose.msra.mxu0 0.0
    %1044 = vmatprep.subr.mxu0 0.0
    %1045 = vmatpush2.xpose.msra.mxu0 0.0
    %1046 = vmatprep.subr.mxu0 0.0
    %1047 = vmatpush2.xpose.msra.mxu0 0.0
    %1048 = vmatprep.subr.mxu0 0.0
    %1049 = vmatpush2.xpose.msra.mxu0 0.0
    %1050 = vmatprep.subr.mxu0 0.0
    %1051 = vmatpush2.xpose.msra.mxu0 0.0
    %1052 = vmatprep.subr.mxu0 0.0
    %1053 = vmatpush2.xpose.msra.mxu0 0.0
    %1054 = vmatprep.subr.mxu0 0.0
    %1055 = vmatpush2.xpose.msra.mxu0 0.0
    %1056 = vmatprep.subr.mxu0 0.0
    %1057 = vmatpush2.xpose.msra.mxu0 0.0
    %1058 = vmatprep.subr.mxu0 0.0
    %1059 = vmatpush2.xpose.msra.mxu0 0.0
    %1060 = vmatprep.subr.mxu0 0.0
    %1061 = vmatpush2.xpose.msra.mxu0 0.0
    %1062 = vmatprep.subr.mxu0 0.0
    %1063 = vmatpush2.xpose.msra.mxu0 0.0
    %1064 = vmatprep.subr.mxu0 0.0
    %1065 = vmatpush2.xpose.msra.mxu0 0.0
    %1066 = vmatprep.subr.mxu0 0.0
    %1067 = vmatpush2.xpose.msra.mxu0 0.0
    %1068 = vmatprep.subr.mxu0 0.0
    %1069 = vmatpush2.xpose.msra.mxu0 0.0
    %1070 = vmatprep.subr.mxu0 0.0
    %1071 = vmatpush2.xpose.msra.mxu0 0.0
    %1072 = vmatprep.subr.mxu0 0.0
    %1073 = vmatpush2.xpose.msra.mxu0 0.0
    %1074 = vmatprep.mubr.f32.mxu0 0.0
    %1075 = vmatmul.mubr.f32.gmra.mxu0 %v1006
    %v1076 = vpop.f32.mrf.mxu0
    %v1077 = vadd.f32 0.0, %v1076
    %v1078 = vpop.f32.mrf.mxu0
    %1079 = vdwg.mxu0
    %1080 = vrot.lane.b32.xlu0 %v170, 112
    %v1081 = vpop.permute.xlu0 %1080
    %1082 = vrot.lane.b32.xlu0 %v170, 80
    %v1083 = vpop.permute.xlu0 %1082
    %v1084 = vsel %vm176, %v1081, 0
    %v1086 = vsel %vm176, %v1083, 0
    %1088 = vmatprep.subr.mxu0 0.0
    %1089 = vmatpush1.xpose.msra.mxu0 0.0
    %1090 = vmatprep.subr.mxu0 0.0
    %1091 = vmatpush1.xpose.msra.mxu0 0.0
    %1092 = vmatprep.subr.mxu0 0.0
    %1093 = vmatpush1.xpose.msra.mxu0 0.0
    %1094 = vmatprep.subr.mxu0 0.0
    %1095 = vmatpush1.xpose.msra.mxu0 0.0
    %1096 = vmatprep.subr.mxu0 0.0
    %1097 = vmatpush1.xpose.msra.mxu0 0.0
    %1098 = vmatprep.subr.mxu0 0.0
    %1099 = vmatpush1.xpose.msra.mxu0 0.0
    %1100 = vmatprep.subr.mxu0 0.0
    %1101 = vmatpush1.xpose.msra.mxu0 0.0
    %1102 = vmatprep.subr.mxu0 0.0
    %1103 = vmatpush1.xpose.msra.mxu0 0.0
    %1104 = vmatprep.subr.mxu0 0.0
    %1105 = vmatpush1.xpose.msra.mxu0 0.0
    %1106 = vmatprep.subr.mxu0 0.0
    %1107 = vmatpush1.xpose.msra.mxu0 0.0
    %1108 = vmatprep.subr.mxu0 0.0
    %1109 = vmatpush1.xpose.msra.mxu0 0.0
    %1110 = vmatprep.subr.mxu0 0.0
    %1111 = vmatpush1.xpose.msra.mxu0 0.0
    %1112 = vmatprep.subr.mxu0 0.0
    %1113 = vmatpush1.xpose.msra.mxu0 0.0
    %1114 = vmatprep.subr.mxu0 0.0
    %1115 = vmatpush1.xpose.msra.mxu0 0.0
    %1116 = vmatprep.subr.mxu0 0.0
    %1117 = vmatpush1.xpose.msra.mxu0 0.0
    %1118 = vmatprep.subr.mxu0 0.0
    %1119 = vmatpush1.xpose.msra.mxu0 %v1086
    %1120 = vmatprep.subr.mxu0 0.0
    %1121 = vmatpush2.xpose.msra.mxu0 0.0
    %1122 = vmatprep.subr.mxu0 0.0
    %1123 = vmatpush2.xpose.msra.mxu0 0.0
    %1124 = vmatprep.subr.mxu0 0.0
    %1125 = vmatpush2.xpose.msra.mxu0 0.0
    %1126 = vmatprep.subr.mxu0 0.0
    %1127 = vmatpush2.xpose.msra.mxu0 0.0
    %1128 = vmatprep.subr.mxu0 0.0
    %1129 = vmatpush2.xpose.msra.mxu0 0.0
    %1130 = vmatprep.subr.mxu0 0.0
    %1131 = vmatpush2.xpose.msra.mxu0 0.0
    %1132 = vmatprep.subr.mxu0 0.0
    %1133 = vmatpush2.xpose.msra.mxu0 0.0
    %1134 = vmatprep.subr.mxu0 0.0
    %1135 = vmatpush2.xpose.msra.mxu0 0.0
    %1136 = vmatprep.subr.mxu0 0.0
    %1137 = vmatpush2.xpose.msra.mxu0 0.0
    %1138 = vmatprep.subr.mxu0 0.0
    %1139 = vmatpush2.xpose.msra.mxu0 0.0
    %1140 = vmatprep.subr.mxu0 0.0
    %1141 = vmatpush2.xpose.msra.mxu0 0.0
    %1142 = vmatprep.subr.mxu0 0.0
    %1143 = vmatpush2.xpose.msra.mxu0 0.0
    %1144 = vmatprep.subr.mxu0 0.0
    %1145 = vmatpush2.xpose.msra.mxu0 0.0
    %1146 = vmatprep.subr.mxu0 0.0
    %1147 = vmatpush2.xpose.msra.mxu0 0.0
    %1148 = vmatprep.subr.mxu0 0.0
    %1149 = vmatpush2.xpose.msra.mxu0 0.0
    %1150 = vmatprep.subr.mxu0 0.0
    %1151 = vmatpush2.xpose.msra.mxu0 0.0
    %1152 = vmatprep.mubr.f32.mxu0 0.0
    %1153 = vmatmul.mubr.f32.gmra.mxu0 %v1084
    %v1154 = vpop.f32.mrf.mxu0
    %v1155 = vadd.f32 0.0, %v1154
    %v1156 = vpop.f32.mrf.mxu0
    %1157 = vdwg.mxu0
    %v1158 = vsel %vm176, %v1077, -inf
    %1159 = vmax.xlane.f32.xlu0 %v1158
    %v1160 = vpop.xlane.xlu0 %1159
    %v1161 = vsel %vm176, %v1155, -inf
    %1162 = vmax.xlane.f32.xlu0 %v1161
    %v1163 = vpop.xlane.xlu0 %1162
    %v1164 = vsub.f32 %v1077, %v1160
    %v1165 = vsub.f32 %v1155, %v1163
    %v1166 = vmul.f32 %v1164, 1.442695
    %v1167 = vpow.pop %v1166
    %v1168 = vmul.f32 %v1165, 1.442695
    %v1169 = vpow.pop %v1168
    %v1170 = vsel %vm176, %v1167, 0.0
    %1171 = vadd.xlane.f32.xlu0 %v1170
    %v1172 = vpop.xlane.xlu0 %1171
    %v1173 = vsel %vm176, %v1169, 0.0
    %1174 = vadd.xlane.f32.xlu0 %v1173
    %v1175 = vpop.xlane.xlu0 %1174
    %v1176 = vrcp.pop %v1172
    %v1177 = vrcp.pop %v1175
    %v1178 = vmul.f32 %v1167, %v1176
    %v1179 = vmul.f32 %v1169, %v1177
    %1180 = vrot.lane.b32.xlu0 %v165, 48
    %v1181 = vpop.permute.xlu0 %1180
    %v1184 = vsel %vm176, %v1178, 0
    %1186 = vmatprep.subr.mxu0 0.0
    %1187 = vmatpush1.msra.mxu0 0.0
    %1188 = vmatprep.subr.mxu0 0.0
    %1189 = vmatpush1.msra.mxu0 0.0
    %1190 = vmatprep.subr.mxu0 0.0
    %1191 = vmatpush1.msra.mxu0 0.0
    %1192 = vmatprep.subr.mxu0 0.0
    %1193 = vmatpush1.msra.mxu0 0.0
    %1194 = vmatprep.subr.mxu0 0.0
    %1195 = vmatpush1.msra.mxu0 0.0
    %1196 = vmatprep.subr.mxu0 0.0
    %1197 = vmatpush1.msra.mxu0 0.0
    %1198 = vmatprep.subr.mxu0 0.0
    %1199 = vmatpush1.msra.mxu0 0.0
    %1200 = vmatprep.subr.mxu0 0.0
    %1201 = vmatpush1.msra.mxu0 0.0
    %1202 = vmatprep.subr.mxu0 0.0
    %1203 = vmatpush1.msra.mxu0 0.0
    %1204 = vmatprep.subr.mxu0 0.0
    %1205 = vmatpush1.msra.mxu0 0.0
    %1206 = vmatprep.subr.mxu0 0.0
    %1207 = vmatpush1.msra.mxu0 0.0
    %1208 = vmatprep.subr.mxu0 0.0
    %1209 = vmatpush1.msra.mxu0 0.0
    %1210 = vmatprep.subr.mxu0 0.0
    %1211 = vmatpush1.msra.mxu0 0.0
    %1212 = vmatprep.subr.mxu0 0.0
    %1213 = vmatpush1.msra.mxu0 0.0
    %1214 = vmatprep.subr.mxu0 0.0
    %1215 = vmatpush1.msra.mxu0 0.0
    %1216 = vmatprep.subr.mxu0 0.0
    %1217 = vmatpush1.msra.mxu0 %v1181
    %1218 = vmatprep.subr.mxu0 0.0
    %1219 = vmatpush2.msra.mxu0 0.0
    %1220 = vmatprep.subr.mxu0 0.0
    %1221 = vmatpush2.msra.mxu0 0.0
    %1222 = vmatprep.subr.mxu0 0.0
    %1223 = vmatpush2.msra.mxu0 0.0
    %1224 = vmatprep.subr.mxu0 0.0
    %1225 = vmatpush2.msra.mxu0 0.0
    %1226 = vmatprep.subr.mxu0 0.0
    %1227 = vmatpush2.msra.mxu0 0.0
    %1228 = vmatprep.subr.mxu0 0.0
    %1229 = vmatpush2.msra.mxu0 0.0
    %1230 = vmatprep.subr.mxu0 0.0
    %1231 = vmatpush2.msra.mxu0 0.0
    %1232 = vmatprep.subr.mxu0 0.0
    %1233 = vmatpush2.msra.mxu0 0.0
    %1234 = vmatprep.subr.mxu0 0.0
    %1235 = vmatpush2.msra.mxu0 0.0
    %1236 = vmatprep.subr.mxu0 0.0
    %1237 = vmatpush2.msra.mxu0 0.0
    %1238 = vmatprep.subr.mxu0 0.0
    %1239 = vmatpush2.msra.mxu0 0.0
    %1240 = vmatprep.subr.mxu0 0.0
    %1241 = vmatpush2.msra.mxu0 0.0
    %1242 = vmatprep.subr.mxu0 0.0
    %1243 = vmatpush2.msra.mxu0 0.0
    %1244 = vmatprep.subr.mxu0 0.0
    %1245 = vmatpush2.msra.mxu0 0.0
    %1246 = vmatprep.subr.mxu0 0.0
    %1247 = vmatpush2.msra.mxu0 0.0
    %1248 = vmatprep.subr.mxu0 0.0
    %1249 = vmatpush2.msra.mxu0 0.0
    %1250 = vmatprep.mubr.f32.mxu0 0.0
    %1251 = vmatmul.mubr.f32.gmra.mxu0 %v1184
    %v1252 = vpop.f32.mrf.mxu0
    %v1253 = vadd.f32 0.0, %v1252
    %v1254 = vpop.f32.mrf.mxu0
    %1255 = vdwg.mxu0
    %1256 = vrot.lane.b32.xlu0 %v170, 48
    %v1257 = vpop.permute.xlu0 %1256
    %v1260 = vsel %vm176, %v1179, 0
    %1262 = vmatprep.subr.mxu0 0.0
    %1263 = vmatpush1.msra.mxu0 0.0
    %1264 = vmatprep.subr.mxu0 0.0
    %1265 = vmatpush1.msra.mxu0 0.0
    %1266 = vmatprep.subr.mxu0 0.0
    %1267 = vmatpush1.msra.mxu0 0.0
    %1268 = vmatprep.subr.mxu0 0.0
    %1269 = vmatpush1.msra.mxu0 0.0
    %1270 = vmatprep.subr.mxu0 0.0
    %1271 = vmatpush1.msra.mxu0 0.0
    %1272 = vmatprep.subr.mxu0 0.0
    %1273 = vmatpush1.msra.mxu0 0.0
    %1274 = vmatprep.subr.mxu0 0.0
    %1275 = vmatpush1.msra.mxu0 0.0
    %1276 = vmatprep.subr.mxu0 0.0
    %1277 = vmatpush1.msra.mxu0 0.0
    %1278 = vmatprep.subr.mxu0 0.0
    %1279 = vmatpush1.msra.mxu0 0.0
    %1280 = vmatprep.subr.mxu0 0.0
    %1281 = vmatpush1.msra.mxu0 0.0
    %1282 = vmatprep.subr.mxu0 0.0
    %1283 = vmatpush1.msra.mxu0 0.0
    %1284 = vmatprep.subr.mxu0 0.0
    %1285 = vmatpush1.msra.mxu0 0.0
    %1286 = vmatprep.subr.mxu0 0.0
    %1287 = vmatpush1.msra.mxu0 0.0
    %1288 = vmatprep.subr.mxu0 0.0
    %1289 = vmatpush1.msra.mxu0 0.0
    %1290 = vmatprep.subr.mxu0 0.0
    %1291 = vmatpush1.msra.mxu0 0.0
    %1292 = vmatprep.subr.mxu0 0.0
    %1293 = vmatpush1.msra.mxu0 %v1257
    %1294 = vmatprep.subr.mxu0 0.0
    %1295 = vmatpush2.msra.mxu0 0.0
    %1296 = vmatprep.subr.mxu0 0.0
    %1297 = vmatpush2.msra.mxu0 0.0
    %1298 = vmatprep.subr.mxu0 0.0
    %1299 = vmatpush2.msra.mxu0 0.0
    %1300 = vmatprep.subr.mxu0 0.0
    %1301 = vmatpush2.msra.mxu0 0.0
    %1302 = vmatprep.subr.mxu0 0.0
    %1303 = vmatpush2.msra.mxu0 0.0
    %1304 = vmatprep.subr.mxu0 0.0
    %1305 = vmatpush2.msra.mxu0 0.0
    %1306 = vmatprep.subr.mxu0 0.0
    %1307 = vmatpush2.msra.mxu0 0.0
    %1308 = vmatprep.subr.mxu0 0.0
    %1309 = vmatpush2.msra.mxu0 0.0
    %1310 = vmatprep.subr.mxu0 0.0
    %1311 = vmatpush2.msra.mxu0 0.0
    %1312 = vmatprep.subr.mxu0 0.0
    %1313 = vmatpush2.msra.mxu0 0.0
    %1314 = vmatprep.subr.mxu0 0.0
    %1315 = vmatpush2.msra.mxu0 0.0
    %1316 = vmatprep.subr.mxu0 0.0
    %1317 = vmatpush2.msra.mxu0 0.0
    %1318 = vmatprep.subr.mxu0 0.0
    %1319 = vmatpush2.msra.mxu0 0.0
    %1320 = vmatprep.subr.mxu0 0.0
    %1321 = vmatpush2.msra.mxu0 0.0
    %1322 = vmatprep.subr.mxu0 0.0
    %1323 = vmatpush2.msra.mxu0 0.0
    %1324 = vmatprep.subr.mxu0 0.0
    %1325 = vmatpush2.msra.mxu0 0.0
    %1326 = vmatprep.mubr.f32.mxu0 0.0
    %1327 = vmatmul.mubr.f32.gmra.mxu0 %v1260
    %v1328 = vpop.f32.mrf.mxu0
    %v1329 = vadd.f32 0.0, %v1328
    %v1330 = vpop.f32.mrf.mxu0
    %1331 = vdwg.mxu0
    %1333 = vrot.lane.b32.xlu0 %v44, 32
    %v1334 = vpop.permute.xlu0 %1333
    %v1337 = vsel %vm176, %v1253, 0
    %v1340 = vsel %vm176, %v1329, 0
    %1342 = vmatprep.subr.mxu0 0.0
    %1343 = vmatpush1.msra.mxu0 0.0
    %1344 = vmatprep.subr.mxu0 0.0
    %1345 = vmatpush1.msra.mxu0 0.0
    %1346 = vmatprep.subr.mxu0 0.0
    %1347 = vmatpush1.msra.mxu0 0.0
    %1348 = vmatprep.subr.mxu0 0.0
    %1349 = vmatpush1.msra.mxu0 0.0
    %1350 = vmatprep.subr.mxu0 0.0
    %1351 = vmatpush1.msra.mxu0 0.0
    %1352 = vmatprep.subr.mxu0 0.0
    %1353 = vmatpush1.msra.mxu0 0.0
    %1354 = vmatprep.subr.mxu0 0.0
    %1355 = vmatpush1.msra.mxu0 0.0
    %1356 = vmatprep.subr.mxu0 0.0
    %1357 = vmatpush1.msra.mxu0 0.0
    %1358 = vmatprep.subr.mxu0 0.0
    %1359 = vmatpush1.msra.mxu0 0.0
    %1360 = vmatprep.subr.mxu0 0.0
    %1361 = vmatpush1.msra.mxu0 0.0
    %1362 = vmatprep.subr.mxu0 0.0
    %1363 = vmatpush1.msra.mxu0 0.0
    %1364 = vmatprep.subr.mxu0 0.0
    %1365 = vmatpush1.msra.mxu0 0.0
    %1366 = vmatprep.subr.mxu0 0.0
    %1367 = vmatpush1.msra.mxu0 0.0
    %1368 = vmatprep.subr.mxu0 0.0
    %1369 = vmatpush1.msra.mxu0 0.0
    %1370 = vmatprep.subr.mxu0 0.0
    %1371 = vmatpush1.msra.mxu0 0.0
    %1372 = vmatprep.subr.mxu0 0.0
    %1373 = vmatpush1.msra.mxu0 %v1334
    %1374 = vmatprep.subr.mxu0 0.0
    %1375 = vmatpush2.msra.mxu0 0.0
    %1376 = vmatprep.subr.mxu0 0.0
    %1377 = vmatpush2.msra.mxu0 0.0
    %1378 = vmatprep.subr.mxu0 0.0
    %1379 = vmatpush2.msra.mxu0 0.0
    %1380 = vmatprep.subr.mxu0 0.0
    %1381 = vmatpush2.msra.mxu0 0.0
    %1382 = vmatprep.subr.mxu0 0.0
    %1383 = vmatpush2.msra.mxu0 0.0
    %1384 = vmatprep.subr.mxu0 0.0
    %1385 = vmatpush2.msra.mxu0 0.0
    %1386 = vmatprep.subr.mxu0 0.0
    %1387 = vmatpush2.msra.mxu0 0.0
    %1388 = vmatprep.subr.mxu0 0.0
    %1389 = vmatpush2.msra.mxu0 0.0
    %1390 = vmatprep.subr.mxu0 0.0
    %1391 = vmatpush2.msra.mxu0 0.0
    %1392 = vmatprep.subr.mxu0 0.0
    %1393 = vmatpush2.msra.mxu0 0.0
    %1394 = vmatprep.subr.mxu0 0.0
    %1395 = vmatpush2.msra.mxu0 0.0
    %1396 = vmatprep.subr.mxu0 0.0
    %1397 = vmatpush2.msra.mxu0 0.0
    %1398 = vmatprep.subr.mxu0 0.0
    %1399 = vmatpush2.msra.mxu0 0.0
    %1400 = vmatprep.subr.mxu0 0.0
    %1401 = vmatpush2.msra.mxu0 0.0
    %1402 = vmatprep.subr.mxu0 0.0
    %1403 = vmatpush2.msra.mxu0 0.0
    %1404 = vmatprep.subr.mxu0 0.0
    %1405 = vmatpush2.msra.mxu0 0.0
    %1406 = vmatprep.mubr.f32.mxu0 0.0
    %1407 = vmatmul.mubr.f32.gmra.mxu0 %v1337
    %v1408 = vpop.f32.mrf.mxu0
    %v1409 = vadd.f32 0.0, %v1408
    %v1410 = vpop.f32.mrf.mxu0
    %1411 = vmatprep.mubr.f32.mxu0 0.0
    %1412 = vmatmul.mubr.f32.gmra.mxu0 %v1340
    %v1413 = vpop.f32.mrf.mxu0
    %v1414 = vadd.f32 0.0, %v1413
    %v1415 = vpop.f32.mrf.mxu0
    %1416 = vdwg.mxu0
    %v1417 = vadd.f32 %v994, %v1409
    %v1418 = vadd.f32 %v999, %v1414
    %1419 = vrot.lane.b32.xlu0 %v165, 104
    %v1420 = vpop.permute.xlu0 %1419
    %1421 = vrot.lane.b32.xlu0 %v165, 72
    %v1422 = vpop.permute.xlu0 %1421
    %v1423 = vsel %vm176, %v1420, 0
    %v1425 = vsel %vm176, %v1422, 0
    %1427 = vmatprep.subr.mxu0 0.0
    %1428 = vmatpush1.xpose.msra.mxu0 0.0
    %1429 = vmatprep.subr.mxu0 0.0
    %1430 = vmatpush1.xpose.msra.mxu0 0.0
    %1431 = vmatprep.subr.mxu0 0.0
    %1432 = vmatpush1.xpose.msra.mxu0 0.0
    %1433 = vmatprep.subr.mxu0 0.0
    %1434 = vmatpush1.xpose.msra.mxu0 0.0
    %1435 = vmatprep.subr.mxu0 0.0
    %1436 = vmatpush1.xpose.msra.mxu0 0.0
    %1437 = vmatprep.subr.mxu0 0.0
    %1438 = vmatpush1.xpose.msra.mxu0 0.0
    %1439 = vmatprep.subr.mxu0 0.0
    %1440 = vmatpush1.xpose.msra.mxu0 0.0
    %1441 = vmatprep.subr.mxu0 0.0
    %1442 = vmatpush1.xpose.msra.mxu0 0.0
    %1443 = vmatprep.subr.mxu0 0.0
    %1444 = vmatpush1.xpose.msra.mxu0 0.0
    %1445 = vmatprep.subr.mxu0 0.0
    %1446 = vmatpush1.xpose.msra.mxu0 0.0
    %1447 = vmatprep.subr.mxu0 0.0
    %1448 = vmatpush1.xpose.msra.mxu0 0.0
    %1449 = vmatprep.subr.mxu0 0.0
    %1450 = vmatpush1.xpose.msra.mxu0 0.0
    %1451 = vmatprep.subr.mxu0 0.0
    %1452 = vmatpush1.xpose.msra.mxu0 0.0
    %1453 = vmatprep.subr.mxu0 0.0
    %1454 = vmatpush1.xpose.msra.mxu0 0.0
    %1455 = vmatprep.subr.mxu0 0.0
    %1456 = vmatpush1.xpose.msra.mxu0 0.0
    %1457 = vmatprep.subr.mxu0 0.0
    %1458 = vmatpush1.xpose.msra.mxu0 %v1425
    %1459 = vmatprep.subr.mxu0 0.0
    %1460 = vmatpush2.xpose.msra.mxu0 0.0
    %1461 = vmatprep.subr.mxu0 0.0
    %1462 = vmatpush2.xpose.msra.mxu0 0.0
    %1463 = vmatprep.subr.mxu0 0.0
    %1464 = vmatpush2.xpose.msra.mxu0 0.0
    %1465 = vmatprep.subr.mxu0 0.0
    %1466 = vmatpush2.xpose.msra.mxu0 0.0
    %1467 = vmatprep.subr.mxu0 0.0
    %1468 = vmatpush2.xpose.msra.mxu0 0.0
    %1469 = vmatprep.subr.mxu0 0.0
    %1470 = vmatpush2.xpose.msra.mxu0 0.0
    %1471 = vmatprep.subr.mxu0 0.0
    %1472 = vmatpush2.xpose.msra.mxu0 0.0
    %1473 = vmatprep.subr.mxu0 0.0
    %1474 = vmatpush2.xpose.msra.mxu0 0.0
    %1475 = vmatprep.subr.mxu0 0.0
    %1476 = vmatpush2.xpose.msra.mxu0 0.0
    %1477 = vmatprep.subr.mxu0 0.0
    %1478 = vmatpush2.xpose.msra.mxu0 0.0
    %1479 = vmatprep.subr.mxu0 0.0
    %1480 = vmatpush2.xpose.msra.mxu0 0.0
    %1481 = vmatprep.subr.mxu0 0.0
    %1482 = vmatpush2.xpose.msra.mxu0 0.0
    %1483 = vmatprep.subr.mxu0 0.0
    %1484 = vmatpush2.xpose.msra.mxu0 0.0
    %1485 = vmatprep.subr.mxu0 0.0
    %1486 = vmatpush2.xpose.msra.mxu0 0.0
    %1487 = vmatprep.subr.mxu0 0.0
    %1488 = vmatpush2.xpose.msra.mxu0 0.0
    %1489 = vmatprep.subr.mxu0 0.0
    %1490 = vmatpush2.xpose.msra.mxu0 0.0
    %1491 = vmatprep.mubr.f32.mxu0 0.0
    %1492 = vmatmul.mubr.f32.gmra.mxu0 %v1423
    %v1493 = vpop.f32.mrf.mxu0
    %v1494 = vadd.f32 0.0, %v1493
    %v1495 = vpop.f32.mrf.mxu0
    %1496 = vdwg.mxu0
    %1497 = vrot.lane.b32.xlu0 %v170, 104
    %v1498 = vpop.permute.xlu0 %1497
    %1499 = vrot.lane.b32.xlu0 %v170, 72
    %v1500 = vpop.permute.xlu0 %1499
    %v1501 = vsel %vm176, %v1498, 0
    %v1503 = vsel %vm176, %v1500, 0
    %1505 = vmatprep.subr.mxu0 0.0
    %1506 = vmatpush1.xpose.msra.mxu0 0.0
    %1507 = vmatprep.subr.mxu0 0.0
    %1508 = vmatpush1.xpose.msra.mxu0 0.0
    %1509 = vmatprep.subr.mxu0 0.0
    %1510 = vmatpush1.xpose.msra.mxu0 0.0
    %1511 = vmatprep.subr.mxu0 0.0
    %1512 = vmatpush1.xpose.msra.mxu0 0.0
    %1513 = vmatprep.subr.mxu0 0.0
    %1514 = vmatpush1.xpose.msra.mxu0 0.0
    %1515 = vmatprep.subr.mxu0 0.0
    %1516 = vmatpush1.xpose.msra.mxu0 0.0
    %1517 = vmatprep.subr.mxu0 0.0
    %1518 = vmatpush1.xpose.msra.mxu0 0.0
    %1519 = vmatprep.subr.mxu0 0.0
    %1520 = vmatpush1.xpose.msra.mxu0 0.0
    %1521 = vmatprep.subr.mxu0 0.0
    %1522 = vmatpush1.xpose.msra.mxu0 0.0
    %1523 = vmatprep.subr.mxu0 0.0
    %1524 = vmatpush1.xpose.msra.mxu0 0.0
    %1525 = vmatprep.subr.mxu0 0.0
    %1526 = vmatpush1.xpose.msra.mxu0 0.0
    %1527 = vmatprep.subr.mxu0 0.0
    %1528 = vmatpush1.xpose.msra.mxu0 0.0
    %1529 = vmatprep.subr.mxu0 0.0
    %1530 = vmatpush1.xpose.msra.mxu0 0.0
    %1531 = vmatprep.subr.mxu0 0.0
    %1532 = vmatpush1.xpose.msra.mxu0 0.0
    %1533 = vmatprep.subr.mxu0 0.0
    %1534 = vmatpush1.xpose.msra.mxu0 0.0
    %1535 = vmatprep.subr.mxu0 0.0
    %1536 = vmatpush1.xpose.msra.mxu0 %v1503
    %1537 = vmatprep.subr.mxu0 0.0
    %1538 = vmatpush2.xpose.msra.mxu0 0.0
    %1539 = vmatprep.subr.mxu0 0.0
    %1540 = vmatpush2.xpose.msra.mxu0 0.0
    %1541 = vmatprep.subr.mxu0 0.0
    %1542 = vmatpush2.xpose.msra.mxu0 0.0
    %1543 = vmatprep.subr.mxu0 0.0
    %1544 = vmatpush2.xpose.msra.mxu0 0.0
    %1545 = vmatprep.subr.mxu0 0.0
    %1546 = vmatpush2.xpose.msra.mxu0 0.0
    %1547 = vmatprep.subr.mxu0 0.0
    %1548 = vmatpush2.xpose.msra.mxu0 0.0
    %1549 = vmatprep.subr.mxu0 0.0
    %1550 = vmatpush2.xpose.msra.mxu0 0.0
    %1551 = vmatprep.subr.mxu0 0.0
    %1552 = vmatpush2.xpose.msra.mxu0 0.0
    %1553 = vmatprep.subr.mxu0 0.0
    %1554 = vmatpush2.xpose.msra.mxu0 0.0
    %1555 = vmatprep.subr.mxu0 0.0
    %1556 = vmatpush2.xpose.msra.mxu0 0.0
    %1557 = vmatprep.subr.mxu0 0.0
    %1558 = vmatpush2.xpose.msra.mxu0 0.0
    %1559 = vmatprep.subr.mxu0 0.0
    %1560 = vmatpush2.xpose.msra.mxu0 0.0
    %1561 = vmatprep.subr.mxu0 0.0
    %1562 = vmatpush2.xpose.msra.mxu0 0.0
    %1563 = vmatprep.subr.mxu0 0.0
    %1564 = vmatpush2.xpose.msra.mxu0 0.0
    %1565 = vmatprep.subr.mxu0 0.0
    %1566 = vmatpush2.xpose.msra.mxu0 0.0
    %1567 = vmatprep.subr.mxu0 0.0
    %1568 = vmatpush2.xpose.msra.mxu0 0.0
    %1569 = vmatprep.mubr.f32.mxu0 0.0
    %1570 = vmatmul.mubr.f32.gmra.mxu0 %v1501
    %v1571 = vpop.f32.mrf.mxu0
    %v1572 = vadd.f32 0.0, %v1571
    %v1573 = vpop.f32.mrf.mxu0
    %1574 = vdwg.mxu0
    %v1575 = vsel %vm176, %v1494, -inf
    %1576 = vmax.xlane.f32.xlu0 %v1575
    %v1577 = vpop.xlane.xlu0 %1576
    %v1578 = vsel %vm176, %v1572, -inf
    %1579 = vmax.xlane.f32.xlu0 %v1578
    %v1580 = vpop.xlane.xlu0 %1579
    %v1581 = vsub.f32 %v1494, %v1577
    %v1582 = vsub.f32 %v1572, %v1580
    %v1583 = vmul.f32 %v1581, 1.442695
    %v1584 = vpow.pop %v1583
    %v1585 = vmul.f32 %v1582, 1.442695
    %v1586 = vpow.pop %v1585
    %v1587 = vsel %vm176, %v1584, 0.0
    %1588 = vadd.xlane.f32.xlu0 %v1587
    %v1589 = vpop.xlane.xlu0 %1588
    %v1590 = vsel %vm176, %v1586, 0.0
    %1591 = vadd.xlane.f32.xlu0 %v1590
    %v1592 = vpop.xlane.xlu0 %1591
    %v1593 = vrcp.pop %v1589
    %v1594 = vrcp.pop %v1592
    %v1595 = vmul.f32 %v1584, %v1593
    %v1596 = vmul.f32 %v1586, %v1594
    %1597 = vrot.lane.b32.xlu0 %v165, 40
    %v1598 = vpop.permute.xlu0 %1597
    %v1601 = vsel %vm176, %v1595, 0
    %1603 = vmatprep.subr.mxu0 0.0
    %1604 = vmatpush1.msra.mxu0 0.0
    %1605 = vmatprep.subr.mxu0 0.0
    %1606 = vmatpush1.msra.mxu0 0.0
    %1607 = vmatprep.subr.mxu0 0.0
    %1608 = vmatpush1.msra.mxu0 0.0
    %1609 = vmatprep.subr.mxu0 0.0
    %1610 = vmatpush1.msra.mxu0 0.0
    %1611 = vmatprep.subr.mxu0 0.0
    %1612 = vmatpush1.msra.mxu0 0.0
    %1613 = vmatprep.subr.mxu0 0.0
    %1614 = vmatpush1.msra.mxu0 0.0
    %1615 = vmatprep.subr.mxu0 0.0
    %1616 = vmatpush1.msra.mxu0 0.0
    %1617 = vmatprep.subr.mxu0 0.0
    %1618 = vmatpush1.msra.mxu0 0.0
    %1619 = vmatprep.subr.mxu0 0.0
    %1620 = vmatpush1.msra.mxu0 0.0
    %1621 = vmatprep.subr.mxu0 0.0
    %1622 = vmatpush1.msra.mxu0 0.0
    %1623 = vmatprep.subr.mxu0 0.0
    %1624 = vmatpush1.msra.mxu0 0.0
    %1625 = vmatprep.subr.mxu0 0.0
    %1626 = vmatpush1.msra.mxu0 0.0
    %1627 = vmatprep.subr.mxu0 0.0
    %1628 = vmatpush1.msra.mxu0 0.0
    %1629 = vmatprep.subr.mxu0 0.0
    %1630 = vmatpush1.msra.mxu0 0.0
    %1631 = vmatprep.subr.mxu0 0.0
    %1632 = vmatpush1.msra.mxu0 0.0
    %1633 = vmatprep.subr.mxu0 0.0
    %1634 = vmatpush1.msra.mxu0 %v1598
    %1635 = vmatprep.subr.mxu0 0.0
    %1636 = vmatpush2.msra.mxu0 0.0
    %1637 = vmatprep.subr.mxu0 0.0
    %1638 = vmatpush2.msra.mxu0 0.0
    %1639 = vmatprep.subr.mxu0 0.0
    %1640 = vmatpush2.msra.mxu0 0.0
    %1641 = vmatprep.subr.mxu0 0.0
    %1642 = vmatpush2.msra.mxu0 0.0
    %1643 = vmatprep.subr.mxu0 0.0
    %1644 = vmatpush2.msra.mxu0 0.0
    %1645 = vmatprep.subr.mxu0 0.0
    %1646 = vmatpush2.msra.mxu0 0.0
    %1647 = vmatprep.subr.mxu0 0.0
    %1648 = vmatpush2.msra.mxu0 0.0
    %1649 = vmatprep.subr.mxu0 0.0
    %1650 = vmatpush2.msra.mxu0 0.0
    %1651 = vmatprep.subr.mxu0 0.0
    %1652 = vmatpush2.msra.mxu0 0.0
    %1653 = vmatprep.subr.mxu0 0.0
    %1654 = vmatpush2.msra.mxu0 0.0
    %1655 = vmatprep.subr.mxu0 0.0
    %1656 = vmatpush2.msra.mxu0 0.0
    %1657 = vmatprep.subr.mxu0 0.0
    %1658 = vmatpush2.msra.mxu0 0.0
    %1659 = vmatprep.subr.mxu0 0.0
    %1660 = vmatpush2.msra.mxu0 0.0
    %1661 = vmatprep.subr.mxu0 0.0
    %1662 = vmatpush2.msra.mxu0 0.0
    %1663 = vmatprep.subr.mxu0 0.0
    %1664 = vmatpush2.msra.mxu0 0.0
    %1665 = vmatprep.subr.mxu0 0.0
    %1666 = vmatpush2.msra.mxu0 0.0
    %1667 = vmatprep.mubr.f32.mxu0 0.0
    %1668 = vmatmul.mubr.f32.gmra.mxu0 %v1601
    %v1669 = vpop.f32.mrf.mxu0
    %v1670 = vadd.f32 0.0, %v1669
    %v1671 = vpop.f32.mrf.mxu0
    %1672 = vdwg.mxu0
    %1673 = vrot.lane.b32.xlu0 %v170, 40
    %v1674 = vpop.permute.xlu0 %1673
    %v1677 = vsel %vm176, %v1596, 0
    %1679 = vmatprep.subr.mxu0 0.0
    %1680 = vmatpush1.msra.mxu0 0.0
    %1681 = vmatprep.subr.mxu0 0.0
    %1682 = vmatpush1.msra.mxu0 0.0
    %1683 = vmatprep.subr.mxu0 0.0
    %1684 = vmatpush1.msra.mxu0 0.0
    %1685 = vmatprep.subr.mxu0 0.0
    %1686 = vmatpush1.msra.mxu0 0.0
    %1687 = vmatprep.subr.mxu0 0.0
    %1688 = vmatpush1.msra.mxu0 0.0
    %1689 = vmatprep.subr.mxu0 0.0
    %1690 = vmatpush1.msra.mxu0 0.0
    %1691 = vmatprep.subr.mxu0 0.0
    %1692 = vmatpush1.msra.mxu0 0.0
    %1693 = vmatprep.subr.mxu0 0.0
    %1694 = vmatpush1.msra.mxu0 0.0
    %1695 = vmatprep.subr.mxu0 0.0
    %1696 = vmatpush1.msra.mxu0 0.0
    %1697 = vmatprep.subr.mxu0 0.0
    %1698 = vmatpush1.msra.mxu0 0.0
    %1699 = vmatprep.subr.mxu0 0.0
    %1700 = vmatpush1.msra.mxu0 0.0
    %1701 = vmatprep.subr.mxu0 0.0
    %1702 = vmatpush1.msra.mxu0 0.0
    %1703 = vmatprep.subr.mxu0 0.0
    %1704 = vmatpush1.msra.mxu0 0.0
    %1705 = vmatprep.subr.mxu0 0.0
    %1706 = vmatpush1.msra.mxu0 0.0
    %1707 = vmatprep.subr.mxu0 0.0
    %1708 = vmatpush1.msra.mxu0 0.0
    %1709 = vmatprep.subr.mxu0 0.0
    %1710 = vmatpush1.msra.mxu0 %v1674
    %1711 = vmatprep.subr.mxu0 0.0
    %1712 = vmatpush2.msra.mxu0 0.0
    %1713 = vmatprep.subr.mxu0 0.0
    %1714 = vmatpush2.msra.mxu0 0.0
    %1715 = vmatprep.subr.mxu0 0.0
    %1716 = vmatpush2.msra.mxu0 0.0
    %1717 = vmatprep.subr.mxu0 0.0
    %1718 = vmatpush2.msra.mxu0 0.0
    %1719 = vmatprep.subr.mxu0 0.0
    %1720 = vmatpush2.msra.mxu0 0.0
    %1721 = vmatprep.subr.mxu0 0.0
    %1722 = vmatpush2.msra.mxu0 0.0
    %1723 = vmatprep.subr.mxu0 0.0
    %1724 = vmatpush2.msra.mxu0 0.0
    %1725 = vmatprep.subr.mxu0 0.0
    %1726 = vmatpush2.msra.mxu0 0.0
    %1727 = vmatprep.subr.mxu0 0.0
    %1728 = vmatpush2.msra.mxu0 0.0
    %1729 = vmatprep.subr.mxu0 0.0
    %1730 = vmatpush2.msra.mxu0 0.0
    %1731 = vmatprep.subr.mxu0 0.0
    %1732 = vmatpush2.msra.mxu0 0.0
    %1733 = vmatprep.subr.mxu0 0.0
    %1734 = vmatpush2.msra.mxu0 0.0
    %1735 = vmatprep.subr.mxu0 0.0
    %1736 = vmatpush2.msra.mxu0 0.0
    %1737 = vmatprep.subr.mxu0 0.0
    %1738 = vmatpush2.msra.mxu0 0.0
    %1739 = vmatprep.subr.mxu0 0.0
    %1740 = vmatpush2.msra.mxu0 0.0
    %1741 = vmatprep.subr.mxu0 0.0
    %1742 = vmatpush2.msra.mxu0 0.0
    %1743 = vmatprep.mubr.f32.mxu0 0.0
    %1744 = vmatmul.mubr.f32.gmra.mxu0 %v1677
    %v1745 = vpop.f32.mrf.mxu0
    %v1746 = vadd.f32 0.0, %v1745
    %v1747 = vpop.f32.mrf.mxu0
    %1748 = vdwg.mxu0
    %1750 = vrot.lane.b32.xlu0 %v45, 32
    %v1751 = vpop.permute.xlu0 %1750
    %v1754 = vsel %vm176, %v1670, 0
    %v1757 = vsel %vm176, %v1746, 0
    %1759 = vmatprep.subr.mxu0 0.0
    %1760 = vmatpush1.msra.mxu0 0.0
    %1761 = vmatprep.subr.mxu0 0.0
    %1762 = vmatpush1.msra.mxu0 0.0
    %1763 = vmatprep.subr.mxu0 0.0
    %1764 = vmatpush1.msra.mxu0 0.0
    %1765 = vmatprep.subr.mxu0 0.0
    %1766 = vmatpush1.msra.mxu0 0.0
    %1767 = vmatprep.subr.mxu0 0.0
    %1768 = vmatpush1.msra.mxu0 0.0
    %1769 = vmatprep.subr.mxu0 0.0
    %1770 = vmatpush1.msra.mxu0 0.0
    %1771 = vmatprep.subr.mxu0 0.0
    %1772 = vmatpush1.msra.mxu0 0.0
    %1773 = vmatprep.subr.mxu0 0.0
    %1774 = vmatpush1.msra.mxu0 0.0
    %1775 = vmatprep.subr.mxu0 0.0
    %1776 = vmatpush1.msra.mxu0 0.0
    %1777 = vmatprep.subr.mxu0 0.0
    %1778 = vmatpush1.msra.mxu0 0.0
    %1779 = vmatprep.subr.mxu0 0.0
    %1780 = vmatpush1.msra.mxu0 0.0
    %1781 = vmatprep.subr.mxu0 0.0
    %1782 = vmatpush1.msra.mxu0 0.0
    %1783 = vmatprep.subr.mxu0 0.0
    %1784 = vmatpush1.msra.mxu0 0.0
    %1785 = vmatprep.subr.mxu0 0.0
    %1786 = vmatpush1.msra.mxu0 0.0
    %1787 = vmatprep.subr.mxu0 0.0
    %1788 = vmatpush1.msra.mxu0 0.0
    %1789 = vmatprep.subr.mxu0 0.0
    %1790 = vmatpush1.msra.mxu0 %v1751
    %1791 = vmatprep.subr.mxu0 0.0
    %1792 = vmatpush2.msra.mxu0 0.0
    %1793 = vmatprep.subr.mxu0 0.0
    %1794 = vmatpush2.msra.mxu0 0.0
    %1795 = vmatprep.subr.mxu0 0.0
    %1796 = vmatpush2.msra.mxu0 0.0
    %1797 = vmatprep.subr.mxu0 0.0
    %1798 = vmatpush2.msra.mxu0 0.0
    %1799 = vmatprep.subr.mxu0 0.0
    %1800 = vmatpush2.msra.mxu0 0.0
    %1801 = vmatprep.subr.mxu0 0.0
    %1802 = vmatpush2.msra.mxu0 0.0
    %1803 = vmatprep.subr.mxu0 0.0
    %1804 = vmatpush2.msra.mxu0 0.0
    %1805 = vmatprep.subr.mxu0 0.0
    %1806 = vmatpush2.msra.mxu0 0.0
    %1807 = vmatprep.subr.mxu0 0.0
    %1808 = vmatpush2.msra.mxu0 0.0
    %1809 = vmatprep.subr.mxu0 0.0
    %1810 = vmatpush2.msra.mxu0 0.0
    %1811 = vmatprep.subr.mxu0 0.0
    %1812 = vmatpush2.msra.mxu0 0.0
    %1813 = vmatprep.subr.mxu0 0.0
    %1814 = vmatpush2.msra.mxu0 0.0
    %1815 = vmatprep.subr.mxu0 0.0
    %1816 = vmatpush2.msra.mxu0 0.0
    %1817 = vmatprep.subr.mxu0 0.0
    %1818 = vmatpush2.msra.mxu0 0.0
    %1819 = vmatprep.subr.mxu0 0.0
    %1820 = vmatpush2.msra.mxu0 0.0
    %1821 = vmatprep.subr.mxu0 0.0
    %1822 = vmatpush2.msra.mxu0 0.0
    %1823 = vmatprep.mubr.f32.mxu0 0.0
    %1824 = vmatmul.mubr.f32.gmra.mxu0 %v1754
    %v1825 = vpop.f32.mrf.mxu0
    %v1826 = vadd.f32 0.0, %v1825
    %v1827 = vpop.f32.mrf.mxu0
    %1828 = vmatprep.mubr.f32.mxu0 0.0
    %1829 = vmatmul.mubr.f32.gmra.mxu0 %v1757
    %v1830 = vpop.f32.mrf.mxu0
    %v1831 = vadd.f32 0.0, %v1830
    %v1832 = vpop.f32.mrf.mxu0
    %1833 = vdwg.mxu0
    %v1834 = vadd.f32 %v1417, %v1826
    %v1835 = vadd.f32 %v1418, %v1831
    %1837 = vrot.lane.b32.xlu0 %v91, 32
    %v1838 = vpop.permute.xlu0 %1837
    %v1840 = vadd.f32 %v1834, %v1838
    %v1841 = vadd.f32 %v1835, %v1838
    %v1842 = vadd.f32 %v1840, %v40
    %v1843 = vadd.f32 %v1841, %v41
    %v1844 = vsel %vm48, %v1842, 0.0
    %1845 = vadd.xlane.f32.xlu0 %v1844
    %v1846 = vpop.xlane.xlu0 %1845
    %v1847 = vsel %vm48, %v1843, 0.0
    %1848 = vadd.xlane.f32.xlu0 %v1847
    %v1849 = vpop.xlane.xlu0 %1848
    %v1850 = vmul.f32 %v1846, %v55
    %v1851 = vmul.f32 %v1849, %v55
    %v1852 = vsub.f32 %v1842, %v1850
    %v1853 = vsub.f32 %v1843, %v1851
    %v1854 = vmul.f32 %v1852, %v1852
    %v1855 = vmul.f32 %v1853, %v1853
    %v1856 = vsel %vm48, %v1854, 0.0
    %1857 = vadd.xlane.f32.xlu0 %v1856
    %v1858 = vpop.xlane.xlu0 %1857
    %v1859 = vsel %vm48, %v1855, 0.0
    %1860 = vadd.xlane.f32.xlu0 %v1859
    %v1861 = vpop.xlane.xlu0 %1860
    %v1862 = vmul.f32 %v1858, %v55
    %v1863 = vmul.f32 %v1861, %v55
    %v1864 = vadd.f32 %v1862, 1e-05
    %v1865 = vadd.f32 %v1863, 1e-05
    %v1866 = vrsqrt.pop %v1864
    %v1867 = vrsqrt.pop %v1865
    %v1868 = vmul.f32 %v1852, %v1866
    %v1869 = vmul.f32 %v1853, %v1867
    %1870 = vrot.lane.b32.xlu0 %v79, 64
    %v1871 = vpop.permute.xlu0 %1870
    %v1873 = vmul.f32 %v1868, %v1871
    %v1874 = vmul.f32 %v1869, %v1871
    %1875 = vrot.lane.b32.xlu0 %v79, 32
    %v1876 = vpop.permute.xlu0 %1875
    %v1878 = vadd.f32 %v1873, %v1876
    %v1879 = vadd.f32 %v1874, %v1876
    %1880 = vst.msk [vmem:[#allocation7] sm:$0xff] %vm48, %v1878
    %1881 = vst.msk [vmem:[#allocation7 + $0x8] sm:$0xff] %vm48, %v1879
    // Predicated region
    $region18: #{tpu_custom_call.1} parent=1 // pred_check
      _
    $region19: #{tpu_custom_call.1} parent=1 // pred_check_branch
      %1883 = sbr.rel (0) target = $region21
    $region20: #{tpu_custom_call.1} parent=1 // pred_region
      %s1885 = ssub.s32 256, 256
      %1886 = vsyncadd [#allocation4], %s1885
      %s1887 = sshll.u32 [#allocation7], 4
      %s1888 = int_to_ptr.vmem [resolvable:$true] %s1887
      %1893 = dma.vmem_to_hbm [thread:$0]  %s1888, 256, %s2, [#allocation4], 128, 128, 8
    $region21: #{tpu_custom_call.1} parent=1 // pred_fallthru
      _
    // Predicated region
    $region22: #{tpu_custom_call.1} parent=1 // pred_check
      _
    $region23: #{tpu_custom_call.1} parent=1 // pred_check_branch
      %1895 = sbr.rel (0) target = $region25
    $region24: #{tpu_custom_call.1} parent=1 // pred_region
      %1896 = dma.done [#allocation4], 256
    $region25: #{tpu_custom_call.1} parent=1 // pred_fallthru
      _
    %1897 = vsyncpa [#allocation3], 1
    %1898 = vsyncpa [#allocation6], 1
    %1899 = vsyncpa [#allocation4], 1

</llo_original>
